<compile_context>
chip_gen: v6e
topology: v6e:2x2x1
jax: 0.10.0
libtpu: 0.0.40
codegen_flags: <defaults>
</compile_context>

<pallas_src>
import numpy as np
import jax
import jax.numpy as jnp
from jax.experimental import pallas as pl
from jax.experimental.pallas import tpu as pltpu

CONV_SPECS = ((3, 1), (3, 2), (3, 3), (1, 1))   # (kernel, dilation); stride = 4
STRIDE = 4


# ----------------------------------------------------------------------------
# Shared helpers
# ----------------------------------------------------------------------------

def conv_out_len(l_in, k, d):
    return (l_in - d * (k - 1) - 1) // STRIDE + 1


def conv_out_lens(d_sc):
    return tuple(conv_out_len(d_sc, k, d) for (k, d) in CONV_SPECS)


def adaptive_pool_matrix(l_in, l_out):
    """Right-multiply matrix P [l_in, l_out]: (x @ P) == AdaptiveAvgPool1d(l_out)
    along x's last axis — exact torch window semantics (down- or up-sampling)."""
    P = np.zeros((l_in, l_out), np.float32)
    for j in range(l_out):
        s = (j * l_in) // l_out
        e = -((-(j + 1) * l_in) // l_out)      # ceil
        P[s:e, j] = 1.0 / float(e - s)
    return P


def _layer_norm(y, gamma, beta, eps=1e-5):
    """nn.LayerNorm over the last dim (biased variance, eps inside sqrt)."""
    mean = jnp.mean(y, axis=-1, keepdims=True)
    c = y - mean
    var = jnp.mean(c * c, axis=-1, keepdims=True)
    return c * jax.lax.rsqrt(var + eps) * gamma + beta


def _branch_shot_counts(shot_num):
    return (shot_num, int(shot_num * 1.5), int(shot_num * 0.5))


def _phase_perm(d_sc):
    """Column permutation grouping stride-4 phases: new col p*Q4+t = old col 4t+p."""
    assert d_sc % STRIDE == 0
    q4 = d_sc // STRIDE
    idx = np.empty((d_sc,), np.int64)
    for p in range(STRIDE):
        idx[p * q4:(p + 1) * q4] = STRIDE * np.arange(q4) + p
    return idx


# ----------------------------------------------------------------------------
# Fused per-layer Pallas kernel (grid = 3 branches)
# ----------------------------------------------------------------------------

def make_layer_kernel(S, D_in, D_sc, C_max):
    q4 = D_sc // STRIDE
    # Static tap-slice starts in the phase-permuted column space:
    # original column 4t + o  ->  permuted column (o%4)*q4 + o//4 + t.
    tap_starts = tuple(
        tuple(((d * j) % STRIDE) * q4 + (d * j) // STRIDE for j in range(k))
        for (k, d) in CONV_SPECS)

    def kernel(x_ref, w_up_ref, b_up_ref, g_up_ref, be_up_ref,
               wconv_ref, bconv_ref, wd_ref, b_dn_ref, g_dn_ref, be_dn_ref,
               m_ref, o_ref):
        x = x_ref[...]                                                # [S, D_in]

        # --- fc_up (phase-permuted weights): Linear + ReLU + LayerNorm -------
        up = jnp.dot(x, w_up_ref[...], preferred_element_type=jnp.float32)
        up = jnp.maximum(up + b_up_ref[...], 0.0)
        up = _layer_norm(up, g_up_ref[...], be_up_ref[...])           # [S, D_sc]

        wconv = wconv_ref[...]                      # [C_max, n_taps*S]
        bconv = bconv_ref[...]                      # [C_max, 4]

        # --- frame->shot pool + 4 Conv1d + ReLU + pool-back + fc_down Linear -
        # pooling is pre-folded into wconv (W_tap @ pfs) and wd_fold (Q @ W_down);
        # each conv is ONE matmul on sublane-aligned stacked tap slices of `up`.
        down_lin = jnp.zeros((C_max, D_in), jnp.float32)
        w_off = 0
        for i, starts in enumerate(tap_starts):
            k = len(starts)
            p_stack = jnp.concatenate(
                [up[:, st:st + q4] for st in starts], axis=0)          # [k*S, q4]
            w_i = wconv[:, w_off:w_off + k * S]                        # [C_max, k*S]
            acc = jnp.dot(w_i, p_stack,
                          preferred_element_type=jnp.float32)          # [C_max, q4]
            out_i = jnp.maximum(acc + bconv[:, i:i + 1], 0.0)
            # wd_ref[i] rows >= l_out_i are zero, masking padded conv positions.
            down_lin = down_lin + jnp.dot(out_i, wd_ref[i],
                                          preferred_element_type=jnp.float32)
            w_off += k * S

        # --- fc_down: (+bias) + ReLU + LayerNorm ------------------------------
        down = jnp.maximum(down_lin + b_dn_ref[...], 0.0)
        down = _layer_norm(down, g_dn_ref[...], be_dn_ref[...])        # [C_max, D_in]

        # --- mergePooling as one-hot matmul (MXU idle here) + residual --------
        merged = jnp.dot(m_ref[...], down, preferred_element_type=jnp.float32)
        o_ref[...] = x + merged                                        # [S, D_in]

    return kernel


def layer_forward(x3, packed):
    """x3: [3, S, D_in] (one sequence per branch). Returns [3, S, D_in]."""
    B, S, D_in = x3.shape
    D_sc = packed['w_up'].shape[-1]
    C_max = packed['wconv'].shape[1]
    kernel = make_layer_kernel(S, D_in, D_sc, C_max)

    inputs = (x3, packed['w_up'], packed['b_up'], packed['g_up'], packed['beta_up'],
              packed['wconv'], packed['bconv'], packed['wd_fold'],
              packed['b_down'], packed['g_down'], packed['beta_down'],
              packed['m_onehot'])

    def bspec(a):
        zeros = (0,) * (a.ndim - 1)
        # Leading branch axis is blocked (and squeezed); rest is one full block.
        return pl.BlockSpec((None,) + a.shape[1:], lambda b, z=zeros: (b,) + z)

    return pl.pallas_call(
        kernel,
        out_shape=jax.ShapeDtypeStruct((B, S, D_in), jnp.float32),
        grid=(B,),
        in_specs=[bspec(a) for a in inputs],
        out_specs=pl.BlockSpec((None, S, D_in), lambda b: (b, 0, 0)),
        compiler_params=pltpu.CompilerParams(
            dimension_semantics=("parallel",)),     # v7x: branches across 2 TCs
    )(*inputs)


def shot_level_encoder_forward(packed_layers, x):
    """x: [1, S, D_in]. Mirrors shotLevelEncoderML.forward."""
    x3 = jnp.concatenate([x, x, x], axis=0)          # layer 0 feeds x to all branches
    for packed in packed_layers:
        x3 = layer_forward(x3, packed)
    return x3[0:1], x3[1:2], x3[2:3]


# ----------------------------------------------------------------------------
# Host-side parameter init (raw, torch-like) and packing for the fused kernel
# ----------------------------------------------------------------------------

def init_branch_raw(key, C, d_sc, d_in):
    keys = jax.random.split(key, 6)
    conv_raw = []
    for ci, (k, d) in enumerate(CONV_SPECS):
        wk, bk = jax.random.split(jax.random.fold_in(keys[0], ci))
        w = 0.1 * jax.random.normal(wk, (C, C, k), jnp.float32)   # torch [out, in, k]
        bvec = 0.1 * jax.random.normal(bk, (C,), jnp.float32)
        conv_raw.append((w, bvec))
    return dict(
        w_up=0.05 * jax.random.normal(keys[1], (d_in, d_sc), jnp.float32),
        b_up=0.05 * jax.random.normal(keys[2], (1, d_sc), jnp.float32),
        g_up=jnp.ones((1, d_sc), jnp.float32),
        beta_up=jnp.zeros((1, d_sc), jnp.float32),
        conv_raw=conv_raw,
        w_down=0.05 * jax.random.normal(keys[3], (d_sc, d_in), jnp.float32),
        b_down=0.05 * jax.random.normal(keys[4], (1, d_in), jnp.float32),
        g_down=jnp.ones((1, d_in), jnp.float32),
        beta_down=jnp.zeros((1, d_in), jnp.float32),
    )


def init_layer_raw(key, shot_num, d_sc, d_in):
    Cs = _branch_shot_counts(shot_num)
    return [init_branch_raw(jax.random.fold_in(key, b), Cs[b], d_sc, d_in)
            for b in range(3)]


def pack_layer_params(raw_branches, S, shot_num, d_sc, d_in):
    """One-time host packing: phase permutation, pool folds, C padding, stacking."""
    Cs = _branch_shot_counts(shot_num)
    C_max = max(Cs)
    q4 = d_sc // STRIDE
    l_outs = conv_out_lens(d_sc)
    l_cat = sum(l_outs)
    perm = _phase_perm(d_sc)

    ups, bups, gups, beups = [], [], [], []
    wconvs, bconvs, wds = [], [], []
    bdns, gdns, bedns, ms = [], [], [], []

    for raw, C in zip(raw_branches, Cs):
        assert S // C >= 1, "mergePooling requires seq_len >= shots in every branch"

        # fc_up with phase-permuted columns (exact: LN is permutation-invariant)
        ups.append(np.asarray(raw['w_up'])[:, perm])
        bups.append(np.asarray(raw['b_up'])[:, perm])
        gups.append(np.asarray(raw['g_up'])[:, perm])
        beups.append(np.asarray(raw['beta_up'])[:, perm])

        # frame->shot pooling matrix folded into the conv weights (padded to C_max)
        pfs_pad = np.zeros((C_max, S), np.float32)
        pfs_pad[:C] = adaptive_pool_matrix(S, C).T
        blocks = []
        bias_cols = np.zeros((C_max, len(CONV_SPECS)), np.float32)
        for ci, ((k, d), (w, bias)) in enumerate(zip(CONV_SPECS, raw['conv_raw'])):
            w_pad = np.zeros((C_max, C_max, k), np.float32)
            w_pad[:C, :C, :] = np.asarray(w)
            for j in range(k):
                blocks.append(w_pad[:, :, j] @ pfs_pad)               # [C_max, S]
            bias_cols[:C, ci] = np.asarray(bias)
        wconvs.append(np.concatenate(blocks, axis=1))                 # [C_max, n_taps*S]
        bconvs.append(bias_cols)

        # pool-back + fc_down Linear folded: wd_fold[i] = Q_block_i @ W_down,
        # padded to q4 rows (zero rows mask the padded conv output positions).
        Q = adaptive_pool_matrix(l_cat, d_sc).astype(np.float64)
        w_fold = (Q @ np.asarray(raw['w_down']).astype(np.float64)).astype(np.float32)
        wd = np.zeros((len(CONV_SPECS), q4, d_in), np.float32)
        off = 0
        for ci, lo in enumerate(l_outs):
            wd[ci, :lo, :] = w_fold[off:off + lo, :]
            off += lo
        wds.append(wd)

        bdns.append(np.asarray(raw['b_down']))
        gdns.append(np.asarray(raw['g_down']))
        bedns.append(np.asarray(raw['beta_down']))

        # mergePooling one-hot matrix (matches torch mergePooling row mapping)
        rows = np.minimum(np.arange(S) // (S // C), C - 1)
        m = np.zeros((S, C_max), np.float32)
        m[np.arange(S), rows] = 1.0
        ms.append(m)

    f32 = lambda xs: jnp.asarray(np.stack(xs).astype(np.float32))
    return dict(
        w_up=f32(ups), b_up=f32(bups), g_up=f32(gups), beta_up=f32(beups),
        wconv=f32(wconvs), bconv=f32(bconvs), wd_fold=f32(wds),
        b_down=f32(bdns), g_down=f32(gdns), beta_down=f32(bedns),
        m_onehot=f32(ms),
    )


# ----------------------------------------------------------------------------
# Pure-JAX reference (mirrors the PyTorch module op-for-op) for validation
# ----------------------------------------------------------------------------

def _ref_pool_last(x, n_out):
    return x @ jnp.asarray(adaptive_pool_matrix(x.shape[-1], n_out))


def reference_branch(x2d, p, C, d_sc):
    up = jnp.maximum(x2d @ p['w_up'] + p['b_up'], 0.0)
    up = _layer_norm(up, p['g_up'], p['beta_up'])
    shot = _ref_pool_last(up.T, C).T                               # [C, d_sc]
    outs = []
    for (w, b), (k, d) in zip(p['conv_raw'], CONV_SPECS):
        lo = conv_out_len(d_sc, k, d)
        idx = STRIDE * np.arange(lo)[:, None] + d * np.arange(k)[None, :]
        patches = shot[:, idx]                                     # [C, lo, k]
        out = jnp.einsum('oij,itj->ot', w, patches) + b[:, None]
        outs.append(jnp.maximum(out, 0.0))
    cat = jnp.concatenate(outs, axis=1)
    pooled = _ref_pool_last(cat, d_sc)
    down = jnp.maximum(pooled @ p['w_down'] + p['b_down'], 0.0)
    down = _layer_norm(down, p['g_down'], p['beta_down'])
    S = x2d.shape[0]
    rows = np.minimum(np.arange(S) // (S // C), C - 1)
    return x2d + down[rows]


def reference_forward(raw_layers, x, shot_num, shot_channels):
    Cs = _branch_shot_counts(shot_num)
    seqs = [x[0], x[0], x[0]]
    for li, lp in enumerate(raw_layers):
        seqs = [reference_branch(seqs[b], lp[b], Cs[b], shot_channels[li])
                for b in range(3)]
    return tuple(s[None] for s in seqs)


# ----------------------------------------------------------------------------
# Demo
# ----------------------------------------------------------------------------

if __name__ == "__main__":
    # Small, (8,128)-aligned shapes consistent with the module's forward:
    #   x: [1, seq_len, input_channel]; shot_num=4 -> branch shot counts (4, 6, 2)
    SEQ_LEN = 16
    INPUT_CHANNEL = 128
    SHOT_CHANNEL = [256]          # one encoder layer
    SHOT_NUM = 4
    LAYER_NUMS = 1

    key = jax.random.PRNGKey(0)
    kx, kp = jax.random.split(key)
    x = jax.random.normal(kx, (1, SEQ_LEN, INPUT_CHANNEL), jnp.float32)

    raw_layers = [init_layer_raw(jax.random.fold_in(kp, li), SHOT_NUM,
                                 SHOT_CHANNEL[li], INPUT_CHANNEL)
                  for li in range(LAYER_NUMS)]
    packed_layers = [pack_layer_params(raw_layers[li], SEQ_LEN, SHOT_NUM,
                                       SHOT_CHANNEL[li], INPUT_CHANNEL)
                     for li in range(LAYER_NUMS)]

    fwd = jax.jit(shot_level_encoder_forward)
    x1, x2, x3 = fwd(packed_layers, x)
    jax.block_until_ready((x1, x2, x3))

    assert x1.shape == (1, SEQ_LEN, INPUT_CHANNEL)
    assert x2.shape == (1, SEQ_LEN, INPUT_CHANNEL)
    assert x3.shape == (1, SEQ_LEN, INPUT_CHANNEL)

    # Numerical check against a pure-JAX op-for-op reference of the module.
    with jax.default_matmul_precision("highest"):
        r1, r2, r3 = reference_forward(raw_layers, x, SHOT_NUM, SHOT_CHANNEL)
    for got, want in zip((x1, x2, x3), (r1, r2, r3)):
        err = float(jnp.max(jnp.abs(got - want)))
        assert err < 2e-2, f"mismatch vs reference: max|diff|={err}"

    print("KERNEL_OK")
</pallas_src>

<mosaic_0001>
module attributes {stable_mosaic.version = 11 : i64} {
  func.func @kernel(%arg0: i32, %arg1: memref<1x16x128xf32, #tpu.memory_space<vmem>>, %arg2: memref<1x128x256xf32, #tpu.memory_space<vmem>>, %arg3: memref<1x1x256xf32, #tpu.memory_space<vmem>>, %arg4: memref<1x1x256xf32, #tpu.memory_space<vmem>>, %arg5: memref<1x1x256xf32, #tpu.memory_space<vmem>>, %arg6: memref<1x6x160xf32, #tpu.memory_space<vmem>>, %arg7: memref<1x6x4xf32, #tpu.memory_space<vmem>>, %arg8: memref<1x4x64x128xf32, #tpu.memory_space<vmem>>, %arg9: memref<1x1x128xf32, #tpu.memory_space<vmem>>, %arg10: memref<1x1x128xf32, #tpu.memory_space<vmem>>, %arg11: memref<1x1x128xf32, #tpu.memory_space<vmem>>, %arg12: memref<1x16x6xf32, #tpu.memory_space<vmem>>, %arg13: memref<1x16x128xf32, #tpu.memory_space<vmem>>) attributes {dimension_semantics = [#tpu.dimension_semantics<parallel>], iteration_bounds = array<i64: 3>, scalar_prefetch = 0 : i64, scratch_operands = 0 : i64, tpu.core_type = #tpu.core_type<tc>, window_params = [{transform_indices = @transform_0, window_bounds = array<i64: 1, 16, 128>}, {transform_indices = @transform_1, window_bounds = array<i64: 1, 128, 256>}, {transform_indices = @transform_2, window_bounds = array<i64: 1, 1, 256>}, {transform_indices = @transform_3, window_bounds = array<i64: 1, 1, 256>}, {transform_indices = @transform_4, window_bounds = array<i64: 1, 1, 256>}, {transform_indices = @transform_5, window_bounds = array<i64: 1, 6, 160>}, {transform_indices = @transform_6, window_bounds = array<i64: 1, 6, 4>}, {transform_indices = @transform_7, window_bounds = array<i64: 1, 4, 64, 128>}, {transform_indices = @transform_8, window_bounds = array<i64: 1, 1, 128>}, {transform_indices = @transform_9, window_bounds = array<i64: 1, 1, 128>}, {transform_indices = @transform_10, window_bounds = array<i64: 1, 1, 128>}, {transform_indices = @transform_11, window_bounds = array<i64: 1, 16, 6>}, {transform_indices = @transform_12, window_bounds = array<i64: 1, 16, 128>}]} {
    %c0 = arith.constant 0 : index
    %c0_0 = arith.constant 0 : index
    %c0_1 = arith.constant 0 : index
    %0 = vector.load %arg1[%c0, %c0_0, %c0_1] : memref<1x16x128xf32, #tpu.memory_space<vmem>>, vector<1x16x128xf32>
    %1 = vector.shape_cast %0 : vector<1x16x128xf32> to vector<16x128xf32>
    %c0_2 = arith.constant 0 : index
    %c0_3 = arith.constant 0 : index
    %c0_4 = arith.constant 0 : index
    %2 = vector.load %arg2[%c0_2, %c0_3, %c0_4] : memref<1x128x256xf32, #tpu.memory_space<vmem>>, vector<1x128x256xf32>
    %3 = vector.shape_cast %2 : vector<1x128x256xf32> to vector<128x256xf32>
    %cst = arith.constant dense<0.000000e+00> : vector<16x256xf32>
    %4 = tpu.matmul %1, %3, %cst {dimension_numbers = #tpu.dot_dimension_numbers<[1], [0], [0], [1], [0, 0, 1, 1], [], []>} : vector<16x128xf32>, vector<128x256xf32>, vector<16x256xf32> -> vector<16x256xf32>
    %c0_5 = arith.constant 0 : index
    %c0_6 = arith.constant 0 : index
    %c0_7 = arith.constant 0 : index
    %5 = vector.load %arg3[%c0_5, %c0_6, %c0_7] : memref<1x1x256xf32, #tpu.memory_space<vmem>>, vector<1x1x256xf32>
    %6 = vector.shape_cast %5 : vector<1x1x256xf32> to vector<1x256xf32>
    %7 = vector.broadcast %6 : vector<1x256xf32> to vector<16x256xf32>
    %8 = arith.addf %4, %7 : vector<16x256xf32>
    %cst_8 = arith.constant 0.000000e+00 : f32
    %9 = vector.broadcast %cst_8 : f32 to vector<16x256xf32>
    %10 = arith.maximumf %8, %9 : vector<16x256xf32>
    %c0_9 = arith.constant 0 : index
    %c0_10 = arith.constant 0 : index
    %c0_11 = arith.constant 0 : index
    %11 = vector.load %arg4[%c0_9, %c0_10, %c0_11] : memref<1x1x256xf32, #tpu.memory_space<vmem>>, vector<1x1x256xf32>
    %12 = vector.shape_cast %11 : vector<1x1x256xf32> to vector<1x256xf32>
    %c0_12 = arith.constant 0 : index
    %c0_13 = arith.constant 0 : index
    %c0_14 = arith.constant 0 : index
    %13 = vector.load %arg5[%c0_12, %c0_13, %c0_14] : memref<1x1x256xf32, #tpu.memory_space<vmem>>, vector<1x1x256xf32>
    %14 = vector.shape_cast %13 : vector<1x1x256xf32> to vector<1x256xf32>
    %cst_15 = arith.constant dense<0.000000e+00> : vector<16xf32>
    %15 = vector.multi_reduction <add>, %10, %cst_15 [1] : vector<16x256xf32> to vector<16xf32>
    %16 = vector.shape_cast %15 : vector<16xf32> to vector<16x1xf32>
    %cst_16 = arith.constant 2.560000e+02 : f32
    %17 = vector.broadcast %cst_16 : f32 to vector<16x1xf32>
    %18 = arith.divf %16, %17 : vector<16x1xf32>
    %19 = vector.broadcast %18 : vector<16x1xf32> to vector<16x256xf32>
    %20 = arith.subf %10, %19 : vector<16x256xf32>
    %21 = arith.mulf %20, %20 : vector<16x256xf32>
    %cst_17 = arith.constant dense<0.000000e+00> : vector<16xf32>
    %22 = vector.multi_reduction <add>, %21, %cst_17 [1] : vector<16x256xf32> to vector<16xf32>
    %23 = vector.shape_cast %22 : vector<16xf32> to vector<16x1xf32>
    %cst_18 = arith.constant 2.560000e+02 : f32
    %24 = vector.broadcast %cst_18 : f32 to vector<16x1xf32>
    %25 = arith.divf %23, %24 : vector<16x1xf32>
    %cst_19 = arith.constant 9.99999974E-6 : f32
    %26 = vector.broadcast %cst_19 : f32 to vector<16x1xf32>
    %27 = arith.addf %25, %26 : vector<16x1xf32>
    %28 = math.rsqrt %27 : vector<16x1xf32>
    %29 = vector.broadcast %28 : vector<16x1xf32> to vector<16x256xf32>
    %30 = arith.mulf %20, %29 : vector<16x256xf32>
    %31 = vector.broadcast %12 : vector<1x256xf32> to vector<16x256xf32>
    %32 = arith.mulf %30, %31 : vector<16x256xf32>
    %33 = vector.broadcast %14 : vector<1x256xf32> to vector<16x256xf32>
    %34 = arith.addf %32, %33 : vector<16x256xf32>
    %c0_20 = arith.constant 0 : index
    %c0_21 = arith.constant 0 : index
    %c0_22 = arith.constant 0 : index
    %35 = vector.load %arg6[%c0_20, %c0_21, %c0_22] : memref<1x6x160xf32, #tpu.memory_space<vmem>>, vector<1x6x160xf32>
    %36 = vector.shape_cast %35 : vector<1x6x160xf32> to vector<6x160xf32>
    %c0_23 = arith.constant 0 : index
    %c0_24 = arith.constant 0 : index
    %c0_25 = arith.constant 0 : index
    %37 = vector.load %arg7[%c0_23, %c0_24, %c0_25] : memref<1x6x4xf32, #tpu.memory_space<vmem>>, vector<1x6x4xf32>
    %38 = vector.shape_cast %37 : vector<1x6x4xf32> to vector<6x4xf32>
    %cst_26 = arith.constant 0.000000e+00 : f32
    %39 = vector.broadcast %cst_26 : f32 to vector<6x128xf32>
    %40 = vector.extract_strided_slice %34 {offsets = [0, 0], sizes = [16, 64], strides = [1, 1]} : vector<16x256xf32> to vector<16x64xf32>
    %41 = vector.extract_strided_slice %34 {offsets = [0, 64], sizes = [16, 64], strides = [1, 1]} : vector<16x256xf32> to vector<16x64xf32>
    %42 = vector.extract_strided_slice %34 {offsets = [0, 128], sizes = [16, 64], strides = [1, 1]} : vector<16x256xf32> to vector<16x64xf32>
    %43 = tpu.concatenate %40, %41, %42 in 0 : vector<16x64xf32>, vector<16x64xf32>, vector<16x64xf32> -> vector<48x64xf32>
    %44 = vector.extract_strided_slice %36 {offsets = [0, 0], sizes = [6, 48], strides = [1, 1]} : vector<6x160xf32> to vector<6x48xf32>
    %cst_27 = arith.constant dense<0.000000e+00> : vector<6x64xf32>
    %45 = tpu.matmul %44, %43, %cst_27 {dimension_numbers = #tpu.dot_dimension_numbers<[1], [0], [0], [1], [0, 0, 1, 1], [], []>} : vector<6x48xf32>, vector<48x64xf32>, vector<6x64xf32> -> vector<6x64xf32>
    %46 = vector.extract_strided_slice %38 {offsets = [0, 0], sizes = [6, 1], strides = [1, 1]} : vector<6x4xf32> to vector<6x1xf32>
    %47 = vector.broadcast %46 : vector<6x1xf32> to vector<6x64xf32>
    %48 = arith.addf %45, %47 : vector<6x64xf32>
    %cst_28 = arith.constant 0.000000e+00 : f32
    %49 = vector.broadcast %cst_28 : f32 to vector<6x64xf32>
    %50 = arith.maximumf %48, %49 : vector<6x64xf32>
    %c0_29 = arith.constant 0 : index
    %c0_30 = arith.constant 0 : index
    %c0_31 = arith.constant 0 : index
    %c0_32 = arith.constant 0 : index
    %51 = vector.load %arg8[%c0_29, %c0_30, %c0_31, %c0_32] : memref<1x4x64x128xf32, #tpu.memory_space<vmem>>, vector<1x1x64x128xf32>
    %52 = vector.shape_cast %51 : vector<1x1x64x128xf32> to vector<64x128xf32>
    %cst_33 = arith.constant dense<0.000000e+00> : vector<6x128xf32>
    %53 = tpu.matmul %50, %52, %cst_33 {dimension_numbers = #tpu.dot_dimension_numbers<[1], [0], [0], [1], [0, 0, 1, 1], [], []>} : vector<6x64xf32>, vector<64x128xf32>, vector<6x128xf32> -> vector<6x128xf32>
    %54 = arith.addf %39, %53 : vector<6x128xf32>
    %55 = vector.extract_strided_slice %34 {offsets = [0, 0], sizes = [16, 64], strides = [1, 1]} : vector<16x256xf32> to vector<16x64xf32>
    %56 = vector.extract_strided_slice %34 {offsets = [0, 128], sizes = [16, 64], strides = [1, 1]} : vector<16x256xf32> to vector<16x64xf32>
    %57 = vector.extract_strided_slice %34 {offsets = [0, 1], sizes = [16, 64], strides = [1, 1]} : vector<16x256xf32> to vector<16x64xf32>
    %58 = tpu.concatenate %55, %56, %57 in 0 : vector<16x64xf32>, vector<16x64xf32>, vector<16x64xf32> -> vector<48x64xf32>
    %59 = vector.extract_strided_slice %36 {offsets = [0, 48], sizes = [6, 48], strides = [1, 1]} : vector<6x160xf32> to vector<6x48xf32>
    %cst_34 = arith.constant dense<0.000000e+00> : vector<6x64xf32>
    %60 = tpu.matmul %59, %58, %cst_34 {dimension_numbers = #tpu.dot_dimension_numbers<[1], [0], [0], [1], [0, 0, 1, 1], [], []>} : vector<6x48xf32>, vector<48x64xf32>, vector<6x64xf32> -> vector<6x64xf32>
    %61 = vector.extract_strided_slice %38 {offsets = [0, 1], sizes = [6, 1], strides = [1, 1]} : vector<6x4xf32> to vector<6x1xf32>
    %62 = vector.broadcast %61 : vector<6x1xf32> to vector<6x64xf32>
    %63 = arith.addf %60, %62 : vector<6x64xf32>
    %cst_35 = arith.constant 0.000000e+00 : f32
    %64 = vector.broadcast %cst_35 : f32 to vector<6x64xf32>
    %65 = arith.maximumf %63, %64 : vector<6x64xf32>
    %c0_36 = arith.constant 0 : index
    %c1 = arith.constant 1 : index
    %c0_37 = arith.constant 0 : index
    %c0_38 = arith.constant 0 : index
    %66 = vector.load %arg8[%c0_36, %c1, %c0_37, %c0_38] : memref<1x4x64x128xf32, #tpu.memory_space<vmem>>, vector<1x1x64x128xf32>
    %67 = vector.shape_cast %66 : vector<1x1x64x128xf32> to vector<64x128xf32>
    %cst_39 = arith.constant dense<0.000000e+00> : vector<6x128xf32>
    %68 = tpu.matmul %65, %67, %cst_39 {dimension_numbers = #tpu.dot_dimension_numbers<[1], [0], [0], [1], [0, 0, 1, 1], [], []>} : vector<6x64xf32>, vector<64x128xf32>, vector<6x128xf32> -> vector<6x128xf32>
    %69 = arith.addf %54, %68 : vector<6x128xf32>
    %70 = vector.extract_strided_slice %34 {offsets = [0, 0], sizes = [16, 64], strides = [1, 1]} : vector<16x256xf32> to vector<16x64xf32>
    %71 = vector.extract_strided_slice %34 {offsets = [0, 192], sizes = [16, 64], strides = [1, 1]} : vector<16x256xf32> to vector<16x64xf32>
    %72 = vector.extract_strided_slice %34 {offsets = [0, 129], sizes = [16, 64], strides = [1, 1]} : vector<16x256xf32> to vector<16x64xf32>
    %73 = tpu.concatenate %70, %71, %72 in 0 : vector<16x64xf32>, vector<16x64xf32>, vector<16x64xf32> -> vector<48x64xf32>
    %74 = vector.extract_strided_slice %36 {offsets = [0, 96], sizes = [6, 48], strides = [1, 1]} : vector<6x160xf32> to vector<6x48xf32>
    %cst_40 = arith.constant dense<0.000000e+00> : vector<6x64xf32>
    %75 = tpu.matmul %74, %73, %cst_40 {dimension_numbers = #tpu.dot_dimension_numbers<[1], [0], [0], [1], [0, 0, 1, 1], [], []>} : vector<6x48xf32>, vector<48x64xf32>, vector<6x64xf32> -> vector<6x64xf32>
    %76 = vector.extract_strided_slice %38 {offsets = [0, 2], sizes = [6, 1], strides = [1, 1]} : vector<6x4xf32> to vector<6x1xf32>
    %77 = vector.broadcast %76 : vector<6x1xf32> to vector<6x64xf32>
    %78 = arith.addf %75, %77 : vector<6x64xf32>
    %cst_41 = arith.constant 0.000000e+00 : f32
    %79 = vector.broadcast %cst_41 : f32 to vector<6x64xf32>
    %80 = arith.maximumf %78, %79 : vector<6x64xf32>
    %c0_42 = arith.constant 0 : index
    %c2 = arith.constant 2 : index
    %c0_43 = arith.constant 0 : index
    %c0_44 = arith.constant 0 : index
    %81 = vector.load %arg8[%c0_42, %c2, %c0_43, %c0_44] : memref<1x4x64x128xf32, #tpu.memory_space<vmem>>, vector<1x1x64x128xf32>
    %82 = vector.shape_cast %81 : vector<1x1x64x128xf32> to vector<64x128xf32>
    %cst_45 = arith.constant dense<0.000000e+00> : vector<6x128xf32>
    %83 = tpu.matmul %80, %82, %cst_45 {dimension_numbers = #tpu.dot_dimension_numbers<[1], [0], [0], [1], [0, 0, 1, 1], [], []>} : vector<6x64xf32>, vector<64x128xf32>, vector<6x128xf32> -> vector<6x128xf32>
    %84 = arith.addf %69, %83 : vector<6x128xf32>
    %85 = vector.extract_strided_slice %34 {offsets = [0, 0], sizes = [16, 64], strides = [1, 1]} : vector<16x256xf32> to vector<16x64xf32>
    %86 = vector.extract_strided_slice %36 {offsets = [0, 144], sizes = [6, 16], strides = [1, 1]} : vector<6x160xf32> to vector<6x16xf32>
    %cst_46 = arith.constant dense<0.000000e+00> : vector<6x64xf32>
    %87 = tpu.matmul %86, %85, %cst_46 {dimension_numbers = #tpu.dot_dimension_numbers<[1], [0], [0], [1], [0, 0, 1, 1], [], []>} : vector<6x16xf32>, vector<16x64xf32>, vector<6x64xf32> -> vector<6x64xf32>
    %88 = vector.extract_strided_slice %38 {offsets = [0, 3], sizes = [6, 1], strides = [1, 1]} : vector<6x4xf32> to vector<6x1xf32>
    %89 = vector.broadcast %88 : vector<6x1xf32> to vector<6x64xf32>
    %90 = arith.addf %87, %89 : vector<6x64xf32>
    %cst_47 = arith.constant 0.000000e+00 : f32
    %91 = vector.broadcast %cst_47 : f32 to vector<6x64xf32>
    %92 = arith.maximumf %90, %91 : vector<6x64xf32>
    %c0_48 = arith.constant 0 : index
    %c3 = arith.constant 3 : index
    %c0_49 = arith.constant 0 : index
    %c0_50 = arith.constant 0 : index
    %93 = vector.load %arg8[%c0_48, %c3, %c0_49, %c0_50] : memref<1x4x64x128xf32, #tpu.memory_space<vmem>>, vector<1x1x64x128xf32>
    %94 = vector.shape_cast %93 : vector<1x1x64x128xf32> to vector<64x128xf32>
    %cst_51 = arith.constant dense<0.000000e+00> : vector<6x128xf32>
    %95 = tpu.matmul %92, %94, %cst_51 {dimension_numbers = #tpu.dot_dimension_numbers<[1], [0], [0], [1], [0, 0, 1, 1], [], []>} : vector<6x64xf32>, vector<64x128xf32>, vector<6x128xf32> -> vector<6x128xf32>
    %96 = arith.addf %84, %95 : vector<6x128xf32>
    %c0_52 = arith.constant 0 : index
    %c0_53 = arith.constant 0 : index
    %c0_54 = arith.constant 0 : index
    %97 = vector.load %arg9[%c0_52, %c0_53, %c0_54] : memref<1x1x128xf32, #tpu.memory_space<vmem>>, vector<1x1x128xf32>
    %98 = vector.shape_cast %97 : vector<1x1x128xf32> to vector<1x128xf32>
    %99 = vector.broadcast %98 : vector<1x128xf32> to vector<6x128xf32>
    %100 = arith.addf %96, %99 : vector<6x128xf32>
    %cst_55 = arith.constant 0.000000e+00 : f32
    %101 = vector.broadcast %cst_55 : f32 to vector<6x128xf32>
    %102 = arith.maximumf %100, %101 : vector<6x128xf32>
    %c0_56 = arith.constant 0 : index
    %c0_57 = arith.constant 0 : index
    %c0_58 = arith.constant 0 : index
    %103 = vector.load %arg10[%c0_56, %c0_57, %c0_58] : memref<1x1x128xf32, #tpu.memory_space<vmem>>, vector<1x1x128xf32>
    %104 = vector.shape_cast %103 : vector<1x1x128xf32> to vector<1x128xf32>
    %c0_59 = arith.constant 0 : index
    %c0_60 = arith.constant 0 : index
    %c0_61 = arith.constant 0 : index
    %105 = vector.load %arg11[%c0_59, %c0_60, %c0_61] : memref<1x1x128xf32, #tpu.memory_space<vmem>>, vector<1x1x128xf32>
    %106 = vector.shape_cast %105 : vector<1x1x128xf32> to vector<1x128xf32>
    %cst_62 = arith.constant dense<0.000000e+00> : vector<6xf32>
    %107 = vector.multi_reduction <add>, %102, %cst_62 [1] : vector<6x128xf32> to vector<6xf32>
    %108 = vector.shape_cast %107 : vector<6xf32> to vector<6x1xf32>
    %cst_63 = arith.constant 1.280000e+02 : f32
    %109 = vector.broadcast %cst_63 : f32 to vector<6x1xf32>
    %110 = arith.divf %108, %109 : vector<6x1xf32>
    %111 = vector.broadcast %110 : vector<6x1xf32> to vector<6x128xf32>
    %112 = arith.subf %102, %111 : vector<6x128xf32>
    %113 = arith.mulf %112, %112 : vector<6x128xf32>
    %cst_64 = arith.constant dense<0.000000e+00> : vector<6xf32>
    %114 = vector.multi_reduction <add>, %113, %cst_64 [1] : vector<6x128xf32> to vector<6xf32>
    %115 = vector.shape_cast %114 : vector<6xf32> to vector<6x1xf32>
    %cst_65 = arith.constant 1.280000e+02 : f32
    %116 = vector.broadcast %cst_65 : f32 to vector<6x1xf32>
    %117 = arith.divf %115, %116 : vector<6x1xf32>
    %cst_66 = arith.constant 9.99999974E-6 : f32
    %118 = vector.broadcast %cst_66 : f32 to vector<6x1xf32>
    %119 = arith.addf %117, %118 : vector<6x1xf32>
    %120 = math.rsqrt %119 : vector<6x1xf32>
    %121 = vector.broadcast %120 : vector<6x1xf32> to vector<6x128xf32>
    %122 = arith.mulf %112, %121 : vector<6x128xf32>
    %123 = vector.broadcast %104 : vector<1x128xf32> to vector<6x128xf32>
    %124 = arith.mulf %122, %123 : vector<6x128xf32>
    %125 = vector.broadcast %106 : vector<1x128xf32> to vector<6x128xf32>
    %126 = arith.addf %124, %125 : vector<6x128xf32>
    %c0_67 = arith.constant 0 : index
    %c0_68 = arith.constant 0 : index
    %c0_69 = arith.constant 0 : index
    %127 = vector.load %arg12[%c0_67, %c0_68, %c0_69] : memref<1x16x6xf32, #tpu.memory_space<vmem>>, vector<1x16x6xf32>
    %128 = vector.shape_cast %127 : vector<1x16x6xf32> to vector<16x6xf32>
    %cst_70 = arith.constant dense<0.000000e+00> : vector<16x128xf32>
    %129 = tpu.matmul %128, %126, %cst_70 {dimension_numbers = #tpu.dot_dimension_numbers<[1], [0], [0], [1], [0, 0, 1, 1], [], []>} : vector<16x6xf32>, vector<6x128xf32>, vector<16x128xf32> -> vector<16x128xf32>
    %130 = arith.addf %1, %129 : vector<16x128xf32>
    %c0_71 = arith.constant 0 : index
    %c0_72 = arith.constant 0 : index
    %c0_73 = arith.constant 0 : index
    %131 = vector.load %arg13[%c0_71, %c0_72, %c0_73] : memref<1x16x128xf32, #tpu.memory_space<vmem>>, vector<1x16x128xf32>
    %132 = vector.shape_cast %131 : vector<1x16x128xf32> to vector<16x128xf32>
    %133 = vector.shape_cast %130 : vector<16x128xf32> to vector<1x16x128xf32>
    tpu.vector_store %arg13[%c0_71, %c0_72, %c0_73], %133 {strides = array<i32>} : memref<1x16x128xf32, #tpu.memory_space<vmem>>, vector<1x16x128xf32>,
    return
  }
  func.func @transform_0(%arg0: i32) -> (i32, i32, i32) {
    %c0_i32 = arith.constant 0 : i32
    %c0_i32_0 = arith.constant 0 : i32
    %c0_i32_1 = arith.constant 0 : i32
    return %arg0, %c0_i32, %c0_i32_0 : i32, i32, i32
  }
  func.func @transform_1(%arg0: i32) -> (i32, i32, i32) {
    %c0_i32 = arith.constant 0 : i32
    %c0_i32_0 = arith.constant 0 : i32
    %c0_i32_1 = arith.constant 0 : i32
    return %arg0, %c0_i32, %c0_i32_0 : i32, i32, i32
  }
  func.func @transform_2(%arg0: i32) -> (i32, i32, i32) {
    %c0_i32 = arith.constant 0 : i32
    %c0_i32_0 = arith.constant 0 : i32
    %c0_i32_1 = arith.constant 0 : i32
    return %arg0, %c0_i32, %c0_i32_0 : i32, i32, i32
  }
  func.func @transform_3(%arg0: i32) -> (i32, i32, i32) {
    %c0_i32 = arith.constant 0 : i32
    %c0_i32_0 = arith.constant 0 : i32
    %c0_i32_1 = arith.constant 0 : i32
    return %arg0, %c0_i32, %c0_i32_0 : i32, i32, i32
  }
  func.func @transform_4(%arg0: i32) -> (i32, i32, i32) {
    %c0_i32 = arith.constant 0 : i32
    %c0_i32_0 = arith.constant 0 : i32
    %c0_i32_1 = arith.constant 0 : i32
    return %arg0, %c0_i32, %c0_i32_0 : i32, i32, i32
  }
  func.func @transform_5(%arg0: i32) -> (i32, i32, i32) {
    %c0_i32 = arith.constant 0 : i32
    %c0_i32_0 = arith.constant 0 : i32
    %c0_i32_1 = arith.constant 0 : i32
    return %arg0, %c0_i32, %c0_i32_0 : i32, i32, i32
  }
  func.func @transform_6(%arg0: i32) -> (i32, i32, i32) {
    %c0_i32 = arith.constant 0 : i32
    %c0_i32_0 = arith.constant 0 : i32
    %c0_i32_1 = arith.constant 0 : i32
    return %arg0, %c0_i32, %c0_i32_0 : i32, i32, i32
  }
  func.func @transform_7(%arg0: i32) -> (i32, i32, i32, i32) {
    %c0_i32 = arith.constant 0 : i32
    %c0_i32_0 = arith.constant 0 : i32
    %c0_i32_1 = arith.constant 0 : i32
    %c0_i32_2 = arith.constant 0 : i32
    return %arg0, %c0_i32, %c0_i32_0, %c0_i32_1 : i32, i32, i32, i32
  }
  func.func @transform_8(%arg0: i32) -> (i32, i32, i32) {
    %c0_i32 = arith.constant 0 : i32
    %c0_i32_0 = arith.constant 0 : i32
    %c0_i32_1 = arith.constant 0 : i32
    return %arg0, %c0_i32, %c0_i32_0 : i32, i32, i32
  }
  func.func @transform_9(%arg0: i32) -> (i32, i32, i32) {
    %c0_i32 = arith.constant 0 : i32
    %c0_i32_0 = arith.constant 0 : i32
    %c0_i32_1 = arith.constant 0 : i32
    return %arg0, %c0_i32, %c0_i32_0 : i32, i32, i32
  }
  func.func @transform_10(%arg0: i32) -> (i32, i32, i32) {
    %c0_i32 = arith.constant 0 : i32
    %c0_i32_0 = arith.constant 0 : i32
    %c0_i32_1 = arith.constant 0 : i32
    return %arg0, %c0_i32, %c0_i32_0 : i32, i32, i32
  }
  func.func @transform_11(%arg0: i32) -> (i32, i32, i32) {
    %c0_i32 = arith.constant 0 : i32
    %c0_i32_0 = arith.constant 0 : i32
    %c0_i32_1 = arith.constant 0 : i32
    return %arg0, %c0_i32, %c0_i32_0 : i32, i32, i32
  }
  func.func @transform_12(%arg0: i32) -> (i32, i32, i32) {
    %c0_i32 = arith.constant 0 : i32
    %c0_i32_0 = arith.constant 0 : i32
    %c0_i32_1 = arith.constant 0 : i32
    return %arg0, %c0_i32, %c0_i32_0 : i32, i32, i32
  }
}

</mosaic_0001>

<llo_original>
// kernel: shot_level_encoder_forward.1
$region0: #{shot_level_encoder_forward.1}
  #allocation0 [shape = 'u32[]', space=smem, size = 0x4, offset = 0x4, fixed_abs, tag = 'smem constant byte address 0x4 - core index']
  #allocation1 [shape = 'u32[144,128]{1,0:T(1,128)}', space=vmem, size = 0x12000, scoped, tag = 'internal scratch']
  %s0 = inlined_call_operand.vmem [shape: f32[3,16,128], index: 0, kind: input, shape index: {}]
  %s1 = inlined_call_operand.hbm [shape: f32[3,128,256], index: 1, kind: input, shape index: {}]
  %s2 = inlined_call_operand.vmem [shape: f32[3,1,256], index: 2, kind: input, shape index: {}]
  %s3 = inlined_call_operand.vmem [shape: f32[3,1,256], index: 3, kind: input, shape index: {}]
  %s4 = inlined_call_operand.vmem [shape: f32[3,1,256], index: 4, kind: input, shape index: {}]
  %s5 = inlined_call_operand.vmem [shape: f32[3,6,160], index: 5, kind: input, shape index: {}]
  %s6 = inlined_call_operand.vmem [shape: f32[3,6,4], index: 6, kind: input, shape index: {}]
  %s7 = inlined_call_operand.hbm [shape: f32[3,4,64,128], index: 7, kind: input, shape index: {}]
  %s8 = inlined_call_operand.vmem [shape: f32[3,1,128], index: 8, kind: input, shape index: {}]
  %s9 = inlined_call_operand.vmem [shape: f32[3,1,128], index: 9, kind: input, shape index: {}]
  %s10 = inlined_call_operand.vmem [shape: f32[3,1,128], index: 10, kind: input, shape index: {}]
  %s11 = inlined_call_operand.vmem [shape: f32[3,16,6], index: 11, kind: input, shape index: {}]
  %s12 = inlined_call_operand.vmem [shape: f32[3,16,128], index: 12, kind: output, shape index: {}]
  %s13 = sld [smem:[#allocation0]]
  $region89: #{shot_level_encoder_forward.1} parent=0
    _
  %s15 = ssub.s32 1, %s13
  %s16 = scalar_select 0, %s15, %s13
  $region1: #{shot_level_encoder_forward.1} parent=0
    #allocation2 [shape = 'u8[262144]{0}', space=vmem, size = 0x40000, scoped, tag = 'input window, operand 1']
    #allocation3 [shape = 's32[2]{0}', space=sflag, size = 0x8, scoped, tag = 'scoped memory for shot_level_encoder_forward.1']
    #allocation4 [shape = 'u8[262144]{0}', space=vmem, size = 0x40000, scoped, tag = 'input window, operand 7']
    #allocation5 [shape = 's32[2]{0}', space=sflag, size = 0x8, scoped, tag = 'scoped memory for shot_level_encoder_forward.1']
    %17 = vsyncpa [#allocation3], 0
    %s18 = scalar_lea.sflag [#allocation3], 1
    %19 = vsyncpa %s18, 0
    %20 = vsyncpa [#allocation5], 0
    %s21 = scalar_lea.sflag [#allocation5], 1
    %22 = vsyncpa %s21, 0
    loop: start=0, step=1, limit=5
    $region2: #{shot_level_encoder_forward.1} parent=1 // loop_pre_header
      _
    $region3: #{shot_level_encoder_forward.1} parent=1 // loop_header
      %s24 = sphi 0, %s28
      %p25 = scmp.ge.s32.totalorder %s24, 5
      %s34 = sphi 0, %s36
      %s37 = sphi 0, %s34
      %s38 = sphi 0, %s37
      %s54 = sphi 0, %s38
      %s60 = sphi 0, %s62
      %s63 = sphi 0, %s60
      %s64 = sphi 0, %s63
      %s80 = sphi 0, %s64
      %s86 = sphi 0, %s88
      %s89 = sphi 0, %s86
      %s90 = sphi 0, %s89
      %s106 = sphi 0, %s90
      %s112 = sphi 0, %s114
      %s115 = sphi 0, %s112
      %s116 = sphi 0, %s115
      %s132 = sphi 0, %s116
      %s138 = sphi 0, %s140
      %s141 = sphi 0, %s138
      %s142 = sphi 0, %s141
      %s158 = sphi 0, %s142
      %s164 = sphi 0, %s166
      %s167 = sphi 0, %s164
      %s168 = sphi 0, %s167
      %s184 = sphi 0, %s168
      %s190 = sphi 0, %s192
      %s193 = sphi 0, %s190
      %s194 = sphi 0, %s193
      %s210 = sphi 0, %s194
      %s216 = sphi 0, %s218
      %s219 = sphi 0, %s216
      %s220 = sphi 0, %s219
      %s236 = sphi 0, %s220
      %s242 = sphi 0, %s244
      %s245 = sphi 0, %s242
      %s246 = sphi 0, %s245
      %s262 = sphi 0, %s246
      %s268 = sphi 0, %s270
      %s271 = sphi 0, %s268
      %s272 = sphi 0, %s271
      %s288 = sphi 0, %s272
      %s294 = sphi 0, %s296
      %s297 = sphi 0, %s294
      %s298 = sphi 0, %s297
      %s314 = sphi 0, %s298
      %s320 = sphi 0, %s322
      %s323 = sphi 0, %s320
      %s324 = sphi 0, %s323
      %s340 = sphi 0, %s324
      %s346 = sphi 0, %s348
      %s349 = sphi 0, %s346
      %s350 = sphi 0, %s349
      %s366 = sphi 0, %s350
    $region4: #{shot_level_encoder_forward.1} parent=1 // loop_header_branch
      %27 = sbr.rel (%p25) target = $region8
    $region5: #{shot_level_encoder_forward.1} parent=1 // loop_body
      %s29 = ssub.s32 %s24, 1
      %s30 = ssub.s32 %s24, 2
      %s31 = sadd.s32 %s24, 1
      %s32 = ssub.s32 %s24, %s31
      %p33 = scmp.eq.s32.totalorder %s32, 0
      %s35 = sadd.s32 %s34, 1
      %s36 = scalar_select %p33, %s34, %s35
      %p39 = pneg %p33
      %p40 = scmp.eq.s32.totalorder %s24, 2
      %p41 = por %p39, %p40
      %p42 = scmp.ne.s32.totalorder %s34, %s37
      %p43 = scmp.eq.s32.totalorder %s24, 0
      %p44 = por %p42, %p43
      %p45 = scmp.ne.s32.totalorder %s34, %s37
      %p46 = scmp.eq.s32.totalorder %s29, 2
      %p47 = por %p45, %p46
      %p48 = scmp.ne.s32.totalorder %s37, %s38
      %p49 = scmp.eq.s32.totalorder %s29, 0
      %p50 = por %p48, %p49
      %p51 = scmp.ne.s32.totalorder %s37, %s38
      %p52 = scmp.eq.s32.totalorder %s30, 2
      %p53 = por %p51, %p52
      %p55 = scmp.ne.s32.totalorder %s38, %s54
      %p56 = scmp.eq.s32.totalorder %s30, 0
      %p57 = por %p55, %p56
      %s58 = ssub.s32 %s24, %s31
      %p59 = scmp.eq.s32.totalorder %s58, 0
      %s61 = sadd.s32 %s60, 1
      %s62 = scalar_select %p59, %s60, %s61
      %p65 = pneg %p59
      %p66 = scmp.eq.s32.totalorder %s24, 2
      %p67 = por %p65, %p66
      %p68 = scmp.ne.s32.totalorder %s60, %s63
      %p69 = scmp.eq.s32.totalorder %s24, 0
      %p70 = por %p68, %p69
      %p71 = scmp.ne.s32.totalorder %s60, %s63
      %p72 = scmp.eq.s32.totalorder %s29, 2
      %p73 = por %p71, %p72
      %p74 = scmp.ne.s32.totalorder %s63, %s64
      %p75 = scmp.eq.s32.totalorder %s29, 0
      %p76 = por %p74, %p75
      %p77 = scmp.ne.s32.totalorder %s63, %s64
      %p78 = scmp.eq.s32.totalorder %s30, 2
      %p79 = por %p77, %p78
      %p81 = scmp.ne.s32.totalorder %s64, %s80
      %p82 = scmp.eq.s32.totalorder %s30, 0
      %p83 = por %p81, %p82
      %s84 = ssub.s32 %s24, %s31
      %p85 = scmp.eq.s32.totalorder %s84, 0
      %s87 = sadd.s32 %s86, 1
      %s88 = scalar_select %p85, %s86, %s87
      %p91 = pneg %p85
      %p92 = scmp.eq.s32.totalorder %s24, 2
      %p93 = por %p91, %p92
      %p94 = scmp.ne.s32.totalorder %s86, %s89
      %p95 = scmp.eq.s32.totalorder %s24, 0
      %p96 = por %p94, %p95
      %p97 = scmp.ne.s32.totalorder %s86, %s89
      %p98 = scmp.eq.s32.totalorder %s29, 2
      %p99 = por %p97, %p98
      %p100 = scmp.ne.s32.totalorder %s89, %s90
      %p101 = scmp.eq.s32.totalorder %s29, 0
      %p102 = por %p100, %p101
      %p103 = scmp.ne.s32.totalorder %s89, %s90
      %p104 = scmp.eq.s32.totalorder %s30, 2
      %p105 = por %p103, %p104
      %p107 = scmp.ne.s32.totalorder %s90, %s106
      %p108 = scmp.eq.s32.totalorder %s30, 0
      %p109 = por %p107, %p108
      %s110 = ssub.s32 %s24, %s31
      %p111 = scmp.eq.s32.totalorder %s110, 0
      %s113 = sadd.s32 %s112, 1
      %s114 = scalar_select %p111, %s112, %s113
      %p117 = pneg %p111
      %p118 = scmp.eq.s32.totalorder %s24, 2
      %p119 = por %p117, %p118
      %p120 = scmp.ne.s32.totalorder %s112, %s115
      %p121 = scmp.eq.s32.totalorder %s24, 0
      %p122 = por %p120, %p121
      %p123 = scmp.ne.s32.totalorder %s112, %s115
      %p124 = scmp.eq.s32.totalorder %s29, 2
      %p125 = por %p123, %p124
      %p126 = scmp.ne.s32.totalorder %s115, %s116
      %p127 = scmp.eq.s32.totalorder %s29, 0
      %p128 = por %p126, %p127
      %p129 = scmp.ne.s32.totalorder %s115, %s116
      %p130 = scmp.eq.s32.totalorder %s30, 2
      %p131 = por %p129, %p130
      %p133 = scmp.ne.s32.totalorder %s116, %s132
      %p134 = scmp.eq.s32.totalorder %s30, 0
      %p135 = por %p133, %p134
      %s136 = ssub.s32 %s24, %s31
      %p137 = scmp.eq.s32.totalorder %s136, 0
      %s139 = sadd.s32 %s138, 1
      %s140 = scalar_select %p137, %s138, %s139
      %p143 = pneg %p137
      %p144 = scmp.eq.s32.totalorder %s24, 2
      %p145 = por %p143, %p144
      %p146 = scmp.ne.s32.totalorder %s138, %s141
      %p147 = scmp.eq.s32.totalorder %s24, 0
      %p148 = por %p146, %p147
      %p149 = scmp.ne.s32.totalorder %s138, %s141
      %p150 = scmp.eq.s32.totalorder %s29, 2
      %p151 = por %p149, %p150
      %p152 = scmp.ne.s32.totalorder %s141, %s142
      %p153 = scmp.eq.s32.totalorder %s29, 0
      %p154 = por %p152, %p153
      %p155 = scmp.ne.s32.totalorder %s141, %s142
      %p156 = scmp.eq.s32.totalorder %s30, 2
      %p157 = por %p155, %p156
      %p159 = scmp.ne.s32.totalorder %s142, %s158
      %p160 = scmp.eq.s32.totalorder %s30, 0
      %p161 = por %p159, %p160
      %s162 = ssub.s32 %s24, %s31
      %p163 = scmp.eq.s32.totalorder %s162, 0
      %s165 = sadd.s32 %s164, 1
      %s166 = scalar_select %p163, %s164, %s165
      %p169 = pneg %p163
      %p170 = scmp.eq.s32.totalorder %s24, 2
      %p171 = por %p169, %p170
      %p172 = scmp.ne.s32.totalorder %s164, %s167
      %p173 = scmp.eq.s32.totalorder %s24, 0
      %p174 = por %p172, %p173
      %p175 = scmp.ne.s32.totalorder %s164, %s167
      %p176 = scmp.eq.s32.totalorder %s29, 2
      %p177 = por %p175, %p176
      %p178 = scmp.ne.s32.totalorder %s167, %s168
      %p179 = scmp.eq.s32.totalorder %s29, 0
      %p180 = por %p178, %p179
      %p181 = scmp.ne.s32.totalorder %s167, %s168
      %p182 = scmp.eq.s32.totalorder %s30, 2
      %p183 = por %p181, %p182
      %p185 = scmp.ne.s32.totalorder %s168, %s184
      %p186 = scmp.eq.s32.totalorder %s30, 0
      %p187 = por %p185, %p186
      %s188 = ssub.s32 %s24, %s31
      %p189 = scmp.eq.s32.totalorder %s188, 0
      %s191 = sadd.s32 %s190, 1
      %s192 = scalar_select %p189, %s190, %s191
      %p195 = pneg %p189
      %p196 = scmp.eq.s32.totalorder %s24, 2
      %p197 = por %p195, %p196
      %p198 = scmp.ne.s32.totalorder %s190, %s193
      %p199 = scmp.eq.s32.totalorder %s24, 0
      %p200 = por %p198, %p199
      %p201 = scmp.ne.s32.totalorder %s190, %s193
      %p202 = scmp.eq.s32.totalorder %s29, 2
      %p203 = por %p201, %p202
      %p204 = scmp.ne.s32.totalorder %s193, %s194
      %p205 = scmp.eq.s32.totalorder %s29, 0
      %p206 = por %p204, %p205
      %p207 = scmp.ne.s32.totalorder %s193, %s194
      %p208 = scmp.eq.s32.totalorder %s30, 2
      %p209 = por %p207, %p208
      %p211 = scmp.ne.s32.totalorder %s194, %s210
      %p212 = scmp.eq.s32.totalorder %s30, 0
      %p213 = por %p211, %p212
      %s214 = ssub.s32 %s24, %s31
      %p215 = scmp.eq.s32.totalorder %s214, 0
      %s217 = sadd.s32 %s216, 1
      %s218 = scalar_select %p215, %s216, %s217
      %p221 = pneg %p215
      %p222 = scmp.eq.s32.totalorder %s24, 2
      %p223 = por %p221, %p222
      %p224 = scmp.ne.s32.totalorder %s216, %s219
      %p225 = scmp.eq.s32.totalorder %s24, 0
      %p226 = por %p224, %p225
      %p227 = scmp.ne.s32.totalorder %s216, %s219
      %p228 = scmp.eq.s32.totalorder %s29, 2
      %p229 = por %p227, %p228
      %p230 = scmp.ne.s32.totalorder %s219, %s220
      %p231 = scmp.eq.s32.totalorder %s29, 0
      %p232 = por %p230, %p231
      %p233 = scmp.ne.s32.totalorder %s219, %s220
      %p234 = scmp.eq.s32.totalorder %s30, 2
      %p235 = por %p233, %p234
      %p237 = scmp.ne.s32.totalorder %s220, %s236
      %p238 = scmp.eq.s32.totalorder %s30, 0
      %p239 = por %p237, %p238
      %s240 = ssub.s32 %s24, %s31
      %p241 = scmp.eq.s32.totalorder %s240, 0
      %s243 = sadd.s32 %s242, 1
      %s244 = scalar_select %p241, %s242, %s243
      %p247 = pneg %p241
      %p248 = scmp.eq.s32.totalorder %s24, 2
      %p249 = por %p247, %p248
      %p250 = scmp.ne.s32.totalorder %s242, %s245
      %p251 = scmp.eq.s32.totalorder %s24, 0
      %p252 = por %p250, %p251
      %p253 = scmp.ne.s32.totalorder %s242, %s245
      %p254 = scmp.eq.s32.totalorder %s29, 2
      %p255 = por %p253, %p254
      %p256 = scmp.ne.s32.totalorder %s245, %s246
      %p257 = scmp.eq.s32.totalorder %s29, 0
      %p258 = por %p256, %p257
      %p259 = scmp.ne.s32.totalorder %s245, %s246
      %p260 = scmp.eq.s32.totalorder %s30, 2
      %p261 = por %p259, %p260
      %p263 = scmp.ne.s32.totalorder %s246, %s262
      %p264 = scmp.eq.s32.totalorder %s30, 0
      %p265 = por %p263, %p264
      %s266 = ssub.s32 %s24, %s31
      %p267 = scmp.eq.s32.totalorder %s266, 0
      %s269 = sadd.s32 %s268, 1
      %s270 = scalar_select %p267, %s268, %s269
      %p273 = pneg %p267
      %p274 = scmp.eq.s32.totalorder %s24, 2
      %p275 = por %p273, %p274
      %p276 = scmp.ne.s32.totalorder %s268, %s271
      %p277 = scmp.eq.s32.totalorder %s24, 0
      %p278 = por %p276, %p277
      %p279 = scmp.ne.s32.totalorder %s268, %s271
      %p280 = scmp.eq.s32.totalorder %s29, 2
      %p281 = por %p279, %p280
      %p282 = scmp.ne.s32.totalorder %s271, %s272
      %p283 = scmp.eq.s32.totalorder %s29, 0
      %p284 = por %p282, %p283
      %p285 = scmp.ne.s32.totalorder %s271, %s272
      %p286 = scmp.eq.s32.totalorder %s30, 2
      %p287 = por %p285, %p286
      %p289 = scmp.ne.s32.totalorder %s272, %s288
      %p290 = scmp.eq.s32.totalorder %s30, 0
      %p291 = por %p289, %p290
      %s292 = ssub.s32 %s24, %s31
      %p293 = scmp.eq.s32.totalorder %s292, 0
      %s295 = sadd.s32 %s294, 1
      %s296 = scalar_select %p293, %s294, %s295
      %p299 = pneg %p293
      %p300 = scmp.eq.s32.totalorder %s24, 2
      %p301 = por %p299, %p300
      %p302 = scmp.ne.s32.totalorder %s294, %s297
      %p303 = scmp.eq.s32.totalorder %s24, 0
      %p304 = por %p302, %p303
      %p305 = scmp.ne.s32.totalorder %s294, %s297
      %p306 = scmp.eq.s32.totalorder %s29, 2
      %p307 = por %p305, %p306
      %p308 = scmp.ne.s32.totalorder %s297, %s298
      %p309 = scmp.eq.s32.totalorder %s29, 0
      %p310 = por %p308, %p309
      %p311 = scmp.ne.s32.totalorder %s297, %s298
      %p312 = scmp.eq.s32.totalorder %s30, 2
      %p313 = por %p311, %p312
      %p315 = scmp.ne.s32.totalorder %s298, %s314
      %p316 = scmp.eq.s32.totalorder %s30, 0
      %p317 = por %p315, %p316
      %s318 = ssub.s32 %s24, %s31
      %p319 = scmp.eq.s32.totalorder %s318, 0
      %s321 = sadd.s32 %s320, 1
      %s322 = scalar_select %p319, %s320, %s321
      %p325 = pneg %p319
      %p326 = scmp.eq.s32.totalorder %s24, 2
      %p327 = por %p325, %p326
      %p328 = scmp.ne.s32.totalorder %s320, %s323
      %p329 = scmp.eq.s32.totalorder %s24, 0
      %p330 = por %p328, %p329
      %p331 = scmp.ne.s32.totalorder %s320, %s323
      %p332 = scmp.eq.s32.totalorder %s29, 2
      %p333 = por %p331, %p332
      %p334 = scmp.ne.s32.totalorder %s323, %s324
      %p335 = scmp.eq.s32.totalorder %s29, 0
      %p336 = por %p334, %p335
      %p337 = scmp.ne.s32.totalorder %s323, %s324
      %p338 = scmp.eq.s32.totalorder %s30, 2
      %p339 = por %p337, %p338
      %p341 = scmp.ne.s32.totalorder %s324, %s340
      %p342 = scmp.eq.s32.totalorder %s30, 0
      %p343 = por %p341, %p342
      %s344 = ssub.s32 %s24, %s31
      %p345 = scmp.eq.s32.totalorder %s344, 0
      %s347 = sadd.s32 %s346, 1
      %s348 = scalar_select %p345, %s346, %s347
      %p351 = pneg %p345
      %p352 = scmp.eq.s32.totalorder %s24, 2
      %p353 = por %p351, %p352
      %p354 = scmp.ne.s32.totalorder %s346, %s349
      %p355 = scmp.eq.s32.totalorder %s24, 0
      %p356 = por %p354, %p355
      %p357 = scmp.ne.s32.totalorder %s346, %s349
      %p358 = scmp.eq.s32.totalorder %s29, 2
      %p359 = por %p357, %p358
      %p360 = scmp.ne.s32.totalorder %s349, %s350
      %p361 = scmp.eq.s32.totalorder %s29, 0
      %p362 = por %p360, %p361
      %p363 = scmp.ne.s32.totalorder %s349, %s350
      %p364 = scmp.eq.s32.totalorder %s30, 2
      %p365 = por %p363, %p364
      %p367 = scmp.ne.s32.totalorder %s350, %s366
      %p368 = scmp.eq.s32.totalorder %s30, 0
      %p369 = por %p367, %p368
      %p370 = scmp.le.s32.totalorder 1, %s24
      %p371 = scmp.lt.s32.totalorder %s24, 4
      %p372 = pnand %p370, %p371
      %p373 = pneg %p372
      // Predicated region
      $region9: #{shot_level_encoder_forward.1} parent=5 // pred_check
        _
      $region10: #{shot_level_encoder_forward.1} parent=5 // pred_check_branch
        %375 = sbr.rel (%p372) target = $region12
      $region11: #{shot_level_encoder_forward.1} parent=5 // pred_region
        %s376 = ssub.s32 %s24, 1
      $region12: #{shot_level_encoder_forward.1} parent=5 // pred_fallthru
        _
      %p377 = scmp.lt.s32.totalorder %s24, 3
      // Predicated region
      $region13: #{shot_level_encoder_forward.1} parent=5 // pred_check
        %p378 = pneg %p377
      $region14: #{shot_level_encoder_forward.1} parent=5 // pred_check_branch
        %380 = sbr.rel (%p378) target = $region16
      $region15: #{shot_level_encoder_forward.1} parent=5 // pred_region
        // Predicated region
        $region17: #{shot_level_encoder_forward.1} parent=15 // pred_check
          %p381 = pneg %p44
        $region18: #{shot_level_encoder_forward.1} parent=15 // pred_check_branch
          %383 = sbr.rel (%p381) target = $region20
        $region19: #{shot_level_encoder_forward.1} parent=15 // pred_region
          %p384 = scmp.lt.s32.totalorder %s24, 2
          %s385 = scalar_select %p384, %s24, 2
          %s386 = smul.addr %s385, 2
          %s387 = smul.addr %s386, 8
          %s388 = scalar_lea.vmem %s0, %s387
        $region20: #{shot_level_encoder_forward.1} parent=15 // pred_fallthru
          _
        // Predicated region
        $region21: #{shot_level_encoder_forward.1} parent=15 // pred_check
          %p389 = pneg %p70
        $region22: #{shot_level_encoder_forward.1} parent=15 // pred_check_branch
          %391 = sbr.rel (%p389) target = $region24
        $region23: #{shot_level_encoder_forward.1} parent=15 // pred_region
          %s392 = sand.u32 %s60, 1
          %s393 = scalar_lea.sflag [#allocation3], %s392
          %s394 = sand.u32 %s60, 1
          %s395 = smul.addr %s394, 256
          %s396 = scalar_lea.vmem [#allocation2], %s395
          %s398 = ssub.s32 4096, 4096
          %399 = vsyncadd %s393, %s398
          %s400 = smul.addr %s24, 32
          %s401 = smul.addr %s400, 128
          %s402 = scalar_lea.hbm %s1, %s401
          %s403 = sshll.u32 %s396, 4
          %s404 = int_to_ptr.vmem [resolvable:$true] %s403
          %409 = dma.hbm_to_vmem [thread:$0]  %s402, 4096, %s404, %s393, 256, 256, 16
        $region24: #{shot_level_encoder_forward.1} parent=15 // pred_fallthru
          _
        // Predicated region
        $region25: #{shot_level_encoder_forward.1} parent=15 // pred_check
          %p410 = pneg %p96
        $region26: #{shot_level_encoder_forward.1} parent=15 // pred_check_branch
          %412 = sbr.rel (%p410) target = $region28
        $region27: #{shot_level_encoder_forward.1} parent=15 // pred_region
          %p413 = scmp.lt.s32.totalorder %s24, 2
          %s414 = scalar_select %p413, %s24, 2
          %s415 = smul.addr %s414, 2
          %s416 = scalar_lea.vmem %s2, %s415
        $region28: #{shot_level_encoder_forward.1} parent=15 // pred_fallthru
          _
        // Predicated region
        $region29: #{shot_level_encoder_forward.1} parent=15 // pred_check
          %p417 = pneg %p122
        $region30: #{shot_level_encoder_forward.1} parent=15 // pred_check_branch
          %419 = sbr.rel (%p417) target = $region32
        $region31: #{shot_level_encoder_forward.1} parent=15 // pred_region
          %p420 = scmp.lt.s32.totalorder %s24, 2
          %s421 = scalar_select %p420, %s24, 2
          %s422 = smul.addr %s421, 2
          %s423 = scalar_lea.vmem %s3, %s422
        $region32: #{shot_level_encoder_forward.1} parent=15 // pred_fallthru
          _
        // Predicated region
        $region33: #{shot_level_encoder_forward.1} parent=15 // pred_check
          %p424 = pneg %p148
        $region34: #{shot_level_encoder_forward.1} parent=15 // pred_check_branch
          %426 = sbr.rel (%p424) target = $region36
        $region35: #{shot_level_encoder_forward.1} parent=15 // pred_region
          %p427 = scmp.lt.s32.totalorder %s24, 2
          %s428 = scalar_select %p427, %s24, 2
          %s429 = smul.addr %s428, 2
          %s430 = scalar_lea.vmem %s4, %s429
        $region36: #{shot_level_encoder_forward.1} parent=15 // pred_fallthru
          _
        // Predicated region
        $region37: #{shot_level_encoder_forward.1} parent=15 // pred_check
          %p431 = pneg %p174
        $region38: #{shot_level_encoder_forward.1} parent=15 // pred_check_branch
          %433 = sbr.rel (%p431) target = $region40
        $region39: #{shot_level_encoder_forward.1} parent=15 // pred_region
          %p434 = scmp.lt.s32.totalorder %s24, 2
          %s435 = scalar_select %p434, %s24, 2
          %s436 = smul.addr %s435, 2
          %s437 = smul.addr %s436, 8
          %s438 = scalar_lea.vmem %s5, %s437
        $region40: #{shot_level_encoder_forward.1} parent=15 // pred_fallthru
          _
        // Predicated region
        $region41: #{shot_level_encoder_forward.1} parent=15 // pred_check
          %p439 = pneg %p200
        $region42: #{shot_level_encoder_forward.1} parent=15 // pred_check_branch
          %441 = sbr.rel (%p439) target = $region44
        $region43: #{shot_level_encoder_forward.1} parent=15 // pred_region
          %p442 = scmp.lt.s32.totalorder %s24, 2
          %s443 = scalar_select %p442, %s24, 2
          %s444 = smul.addr %s443, 8
          %s445 = scalar_lea.vmem %s6, %s444
        $region44: #{shot_level_encoder_forward.1} parent=15 // pred_fallthru
          _
        // Predicated region
        $region45: #{shot_level_encoder_forward.1} parent=15 // pred_check
          %p446 = pneg %p226
        $region46: #{shot_level_encoder_forward.1} parent=15 // pred_check_branch
          %448 = sbr.rel (%p446) target = $region48
        $region47: #{shot_level_encoder_forward.1} parent=15 // pred_region
          %s449 = sand.u32 %s216, 1
          %s450 = scalar_lea.sflag [#allocation5], %s449
          %s451 = sand.u32 %s216, 1
          %s452 = smul.addr %s451, 256
          %s453 = scalar_lea.vmem [#allocation4], %s452
          %s455 = ssub.s32 4096, 4096
          %456 = vsyncadd %s450, %s455
          %s457 = smul.addr %s24, 32
          %s458 = smul.addr %s457, 128
          %s459 = scalar_lea.hbm %s7, %s458
          %s460 = sshll.u32 %s453, 4
          %s461 = int_to_ptr.vmem [resolvable:$true] %s460
          %466 = dma.hbm_to_vmem [thread:$0]  %s459, 4096, %s461, %s450, 128, 128, 8
        $region48: #{shot_level_encoder_forward.1} parent=15 // pred_fallthru
          _
        // Predicated region
        $region49: #{shot_level_encoder_forward.1} parent=15 // pred_check
          %p467 = pneg %p252
        $region50: #{shot_level_encoder_forward.1} parent=15 // pred_check_branch
          %469 = sbr.rel (%p467) target = $region52
        $region51: #{shot_level_encoder_forward.1} parent=15 // pred_region
          %p470 = scmp.lt.s32.totalorder %s24, 2
          %s471 = scalar_select %p470, %s24, 2
          %s472 = scalar_lea.vmem %s8, %s471
        $region52: #{shot_level_encoder_forward.1} parent=15 // pred_fallthru
          _
        // Predicated region
        $region53: #{shot_level_encoder_forward.1} parent=15 // pred_check
          %p473 = pneg %p278
        $region54: #{shot_level_encoder_forward.1} parent=15 // pred_check_branch
          %475 = sbr.rel (%p473) target = $region56
        $region55: #{shot_level_encoder_forward.1} parent=15 // pred_region
          %p476 = scmp.lt.s32.totalorder %s24, 2
          %s477 = scalar_select %p476, %s24, 2
          %s478 = scalar_lea.vmem %s9, %s477
        $region56: #{shot_level_encoder_forward.1} parent=15 // pred_fallthru
          _
        // Predicated region
        $region57: #{shot_level_encoder_forward.1} parent=15 // pred_check
          %p479 = pneg %p304
        $region58: #{shot_level_encoder_forward.1} parent=15 // pred_check_branch
          %481 = sbr.rel (%p479) target = $region60
        $region59: #{shot_level_encoder_forward.1} parent=15 // pred_region
          %p482 = scmp.lt.s32.totalorder %s24, 2
          %s483 = scalar_select %p482, %s24, 2
          %s484 = scalar_lea.vmem %s10, %s483
        $region60: #{shot_level_encoder_forward.1} parent=15 // pred_fallthru
          _
        // Predicated region
        $region61: #{shot_level_encoder_forward.1} parent=15 // pred_check
          %p485 = pneg %p330
        $region62: #{shot_level_encoder_forward.1} parent=15 // pred_check_branch
          %487 = sbr.rel (%p485) target = $region64
        $region63: #{shot_level_encoder_forward.1} parent=15 // pred_region
          %p488 = scmp.lt.s32.totalorder %s24, 2
          %s489 = scalar_select %p488, %s24, 2
          %s490 = smul.addr %s489, 2
          %s491 = smul.addr %s490, 8
          %s492 = scalar_lea.vmem %s11, %s491
        $region64: #{shot_level_encoder_forward.1} parent=15 // pred_fallthru
          _
      $region16: #{shot_level_encoder_forward.1} parent=5 // pred_fallthru
        _
      %p493 = scmp.le.s32.totalorder 1, %s24
      %p494 = scmp.lt.s32.totalorder %s24, 4
      %p495 = pnand %p493, %p494
      %p496 = pneg %p495
      // Predicated region
      $region65: #{shot_level_encoder_forward.1} parent=5 // pred_check
        _
      $region66: #{shot_level_encoder_forward.1} parent=5 // pred_check_branch
        %498 = sbr.rel (%p495) target = $region68
      $region67: #{shot_level_encoder_forward.1} parent=5 // pred_region
        %s499 = ssub.s32 %s24, 1
        %s500 = sand.u32 %s63, 1
        %s501 = scalar_lea.sflag [#allocation3], %s500
        %s502 = sand.u32 %s63, 1
        %s503 = smul.addr %s502, 256
        %s504 = scalar_lea.vmem [#allocation2], %s503
        // Predicated region
        $region69: #{shot_level_encoder_forward.1} parent=67 // pred_check
          %p505 = pneg %p76
        $region70: #{shot_level_encoder_forward.1} parent=67 // pred_check_branch
          %507 = sbr.rel (%p505) target = $region72
        $region71: #{shot_level_encoder_forward.1} parent=67 // pred_region
          %508 = dma.done %s501, 4096
        $region72: #{shot_level_encoder_forward.1} parent=67 // pred_fallthru
          _
        %s509 = sand.u32 %s219, 1
        %s510 = scalar_lea.sflag [#allocation5], %s509
        %s511 = sand.u32 %s219, 1
        %s512 = smul.addr %s511, 256
        %s513 = scalar_lea.vmem [#allocation4], %s512
        // Predicated region
        $region73: #{shot_level_encoder_forward.1} parent=67 // pred_check
          %p514 = pneg %p232
        $region74: #{shot_level_encoder_forward.1} parent=67 // pred_check_branch
          %516 = sbr.rel (%p514) target = $region76
        $region75: #{shot_level_encoder_forward.1} parent=67 // pred_region
          %517 = dma.done %s510, 4096
        $region76: #{shot_level_encoder_forward.1} parent=67 // pred_fallthru
          _
        %p518 = scmp.lt.s32.totalorder %s29, 2
        %s519 = scalar_select %p518, %s29, 2
        %s520 = smul.addr %s519, 2
        %s521 = smul.addr %s520, 8
        %s522 = scalar_lea.vmem %s0, %s521
        %p523 = pneg %p50
        %p524 = pneg %p47
        %s525 = sand.u32 %s63, 1
        %s526 = scalar_lea.sflag [#allocation3], %s525
        %s527 = sand.u32 %s63, 1
        %s528 = smul.addr %s527, 256
        %s529 = scalar_lea.vmem [#allocation2], %s528
        %p530 = pneg %p76
        %p531 = pneg %p73
        %p532 = scmp.lt.s32.totalorder %s29, 2
        %s533 = scalar_select %p532, %s29, 2
        %s534 = smul.addr %s533, 2
        %s535 = scalar_lea.vmem %s2, %s534
        %p536 = pneg %p102
        %p537 = pneg %p99
        %p538 = scmp.lt.s32.totalorder %s29, 2
        %s539 = scalar_select %p538, %s29, 2
        %s540 = smul.addr %s539, 2
        %s541 = scalar_lea.vmem %s3, %s540
        %p542 = pneg %p128
        %p543 = pneg %p125
        %p544 = scmp.lt.s32.totalorder %s29, 2
        %s545 = scalar_select %p544, %s29, 2
        %s546 = smul.addr %s545, 2
        %s547 = scalar_lea.vmem %s4, %s546
        %p548 = pneg %p154
        %p549 = pneg %p151
        %p550 = scmp.lt.s32.totalorder %s29, 2
        %s551 = scalar_select %p550, %s29, 2
        %s552 = smul.addr %s551, 2
        %s553 = smul.addr %s552, 8
        %s554 = scalar_lea.vmem %s5, %s553
        %p555 = pneg %p180
        %p556 = pneg %p177
        %p557 = scmp.lt.s32.totalorder %s29, 2
        %s558 = scalar_select %p557, %s29, 2
        %s559 = smul.addr %s558, 8
        %s560 = scalar_lea.vmem %s6, %s559
        %p561 = pneg %p206
        %p562 = pneg %p203
        %s563 = sand.u32 %s219, 1
        %s564 = scalar_lea.sflag [#allocation5], %s563
        %s565 = sand.u32 %s219, 1
        %s566 = smul.addr %s565, 256
        %s567 = scalar_lea.vmem [#allocation4], %s566
        %p568 = pneg %p232
        %p569 = pneg %p229
        %p570 = scmp.lt.s32.totalorder %s29, 2
        %s571 = scalar_select %p570, %s29, 2
        %s572 = scalar_lea.vmem %s8, %s571
        %p573 = pneg %p258
        %p574 = pneg %p255
        %p575 = scmp.lt.s32.totalorder %s29, 2
        %s576 = scalar_select %p575, %s29, 2
        %s577 = scalar_lea.vmem %s9, %s576
        %p578 = pneg %p284
        %p579 = pneg %p281
        %p580 = scmp.lt.s32.totalorder %s29, 2
        %s581 = scalar_select %p580, %s29, 2
        %s582 = scalar_lea.vmem %s10, %s581
        %p583 = pneg %p310
        %p584 = pneg %p307
        %p585 = scmp.lt.s32.totalorder %s29, 2
        %s586 = scalar_select %p585, %s29, 2
        %s587 = smul.addr %s586, 2
        %s588 = smul.addr %s587, 8
        %s589 = scalar_lea.vmem %s11, %s588
        %p590 = pneg %p336
        %p591 = pneg %p333
        %p592 = pneg %p362
        %p593 = pneg %p359
        %p594 = scmp.lt.s32.totalorder %s29, 2
        %s595 = scalar_select %p594, %s29, 2
        %s596 = smul.addr %s595, 2
        %s597 = smul.addr %s596, 8
        %s598 = scalar_lea.vmem %s12, %s597
        %p599 = scmp.lt.s32.totalorder %s29, 2
        %s600 = scalar_select %p599, %s29, 2
        %s601 = smul.addr %s600, 2
        %s602 = smul.addr %s601, 8
        %s603 = scalar_lea.vmem %s0, %s602
        %p604 = scmp.lt.s32.totalorder %s29, 2
        %s605 = scalar_select %p604, %s29, 2
        %s606 = smul.addr %s605, 2
        %s607 = scalar_lea.vmem %s2, %s606
        %p608 = scmp.lt.s32.totalorder %s29, 2
        %s609 = scalar_select %p608, %s29, 2
        %s610 = smul.addr %s609, 2
        %s611 = scalar_lea.vmem %s3, %s610
        %p612 = scmp.lt.s32.totalorder %s29, 2
        %s613 = scalar_select %p612, %s29, 2
        %s614 = smul.addr %s613, 2
        %s615 = scalar_lea.vmem %s4, %s614
        %p616 = scmp.lt.s32.totalorder %s29, 2
        %s617 = scalar_select %p616, %s29, 2
        %s618 = smul.addr %s617, 2
        %s619 = smul.addr %s618, 8
        %s620 = scalar_lea.vmem %s5, %s619
        %p621 = scmp.lt.s32.totalorder %s29, 2
        %s622 = scalar_select %p621, %s29, 2
        %s623 = smul.addr %s622, 8
        %s624 = scalar_lea.vmem %s6, %s623
        %p625 = scmp.lt.s32.totalorder %s29, 2
        %s626 = scalar_select %p625, %s29, 2
        %s627 = scalar_lea.vmem %s8, %s626
        %p628 = scmp.lt.s32.totalorder %s29, 2
        %s629 = scalar_select %p628, %s29, 2
        %s630 = scalar_lea.vmem %s9, %s629
        %p631 = scmp.lt.s32.totalorder %s29, 2
        %s632 = scalar_select %p631, %s29, 2
        %s633 = scalar_lea.vmem %s10, %s632
        %p634 = scmp.lt.s32.totalorder %s29, 2
        %s635 = scalar_select %p634, %s29, 2
        %s636 = smul.addr %s635, 2
        %s637 = smul.addr %s636, 8
        %s638 = scalar_lea.vmem %s11, %s637
        %p639 = scmp.lt.s32.totalorder %s29, 2
        %s640 = scalar_select %p639, %s29, 2
        %s641 = smul.addr %s640, 2
        %s642 = smul.addr %s641, 8
        %s643 = scalar_lea.vmem %s12, %s642
        %v644 = vld [vmem:[%s603] sm:$0xff]
        %v645 = vld [vmem:[%s603 + $0x8] sm:$0xff]
        %v646 = vld [vmem:[%s504] sm:$0xff]
        %v647 = vld [vmem:[%s504 + $0x8] sm:$0xff]
        %v648 = vld [vmem:[%s504 + $0x10] sm:$0xff]
        %v649 = vld [vmem:[%s504 + $0x18] sm:$0xff]
        %v650 = vld [vmem:[%s504 + $0x20] sm:$0xff]
        %v651 = vld [vmem:[%s504 + $0x28] sm:$0xff]
        %v652 = vld [vmem:[%s504 + $0x30] sm:$0xff]
        %v653 = vld [vmem:[%s504 + $0x38] sm:$0xff]
        %v654 = vld [vmem:[%s504 + $0x40] sm:$0xff]
        %v655 = vld [vmem:[%s504 + $0x48] sm:$0xff]
        %v656 = vld [vmem:[%s504 + $0x50] sm:$0xff]
        %v657 = vld [vmem:[%s504 + $0x58] sm:$0xff]
        %v658 = vld [vmem:[%s504 + $0x60] sm:$0xff]
        %v659 = vld [vmem:[%s504 + $0x68] sm:$0xff]
        %v660 = vld [vmem:[%s504 + $0x70] sm:$0xff]
        %v661 = vld [vmem:[%s504 + $0x78] sm:$0xff]
        %v662 = vld [vmem:[%s504 + $0x80] sm:$0xff]
        %v663 = vld [vmem:[%s504 + $0x88] sm:$0xff]
        %v664 = vld [vmem:[%s504 + $0x90] sm:$0xff]
        %v665 = vld [vmem:[%s504 + $0x98] sm:$0xff]
        %v666 = vld [vmem:[%s504 + $0xa0] sm:$0xff]
        %v667 = vld [vmem:[%s504 + $0xa8] sm:$0xff]
        %v668 = vld [vmem:[%s504 + $0xb0] sm:$0xff]
        %v669 = vld [vmem:[%s504 + $0xb8] sm:$0xff]
        %v670 = vld [vmem:[%s504 + $0xc0] sm:$0xff]
        %v671 = vld [vmem:[%s504 + $0xc8] sm:$0xff]
        %v672 = vld [vmem:[%s504 + $0xd0] sm:$0xff]
        %v673 = vld [vmem:[%s504 + $0xd8] sm:$0xff]
        %v674 = vld [vmem:[%s504 + $0xe0] sm:$0xff]
        %v675 = vld [vmem:[%s504 + $0xe8] sm:$0xff]
        %v676 = vld [vmem:[%s504 + $0xf0] sm:$0xff]
        %v677 = vld [vmem:[%s504 + $0xf8] sm:$0xff]
        %v678 = vld [vmem:[%s607] sm:$0x3]
        %v680 = vlaneseq
        %v681 = vshrl.u32 %v680, 7
        %v682 = vsub.s32 0, %v681
        %v683 = vrot.slane %v678, %v682
        %v684 = vlaneseq
        %v685 = vshrl.u32 %v684, 7
        %v686 = vsub.s32 1, %v685
        %v687 = vrot.slane %v678, %v686
        %690 = vmatprep.subr.mxu0 %v677
        %691 = vmatpush1.msra.mxu0 %v676
        %692 = vmatprep.subr.mxu0 %v675
        %693 = vmatpush1.msra.mxu0 %v674
        %694 = vmatprep.subr.mxu0 %v673
        %695 = vmatpush1.msra.mxu0 %v672
        %696 = vmatprep.subr.mxu0 %v671
        %697 = vmatpush1.msra.mxu0 %v670
        %698 = vmatprep.subr.mxu0 %v669
        %699 = vmatpush1.msra.mxu0 %v668
        %700 = vmatprep.subr.mxu0 %v667
        %701 = vmatpush1.msra.mxu0 %v666
        %702 = vmatprep.subr.mxu0 %v665
        %703 = vmatpush1.msra.mxu0 %v664
        %704 = vmatprep.subr.mxu0 %v663
        %705 = vmatpush1.msra.mxu0 %v662
        %706 = vmatprep.subr.mxu0 %v661
        %707 = vmatpush1.msra.mxu0 %v660
        %708 = vmatprep.subr.mxu0 %v659
        %709 = vmatpush1.msra.mxu0 %v658
        %710 = vmatprep.subr.mxu0 %v657
        %711 = vmatpush1.msra.mxu0 %v656
        %712 = vmatprep.subr.mxu0 %v655
        %713 = vmatpush1.msra.mxu0 %v654
        %714 = vmatprep.subr.mxu0 %v653
        %715 = vmatpush1.msra.mxu0 %v652
        %716 = vmatprep.subr.mxu0 %v651
        %717 = vmatpush1.msra.mxu0 %v650
        %718 = vmatprep.subr.mxu0 %v649
        %719 = vmatpush1.msra.mxu0 %v648
        %720 = vmatprep.subr.mxu0 %v647
        %721 = vmatpush1.msra.mxu0 %v646
        %722 = vmatprep.subr.mxu0 0.0
        %723 = vmatpush2.msra.mxu0 0.0
        %724 = vmatprep.subr.mxu0 0.0
        %725 = vmatpush2.msra.mxu0 0.0
        %726 = vmatprep.subr.mxu0 0.0
        %727 = vmatpush2.msra.mxu0 0.0
        %728 = vmatprep.subr.mxu0 0.0
        %729 = vmatpush2.msra.mxu0 0.0
        %730 = vmatprep.subr.mxu0 0.0
        %731 = vmatpush2.msra.mxu0 0.0
        %732 = vmatprep.subr.mxu0 0.0
        %733 = vmatpush2.msra.mxu0 0.0
        %734 = vmatprep.subr.mxu0 0.0
        %735 = vmatpush2.msra.mxu0 0.0
        %736 = vmatprep.subr.mxu0 0.0
        %737 = vmatpush2.msra.mxu0 0.0
        %738 = vmatprep.subr.mxu0 0.0
        %739 = vmatpush2.msra.mxu0 0.0
        %740 = vmatprep.subr.mxu0 0.0
        %741 = vmatpush2.msra.mxu0 0.0
        %742 = vmatprep.subr.mxu0 0.0
        %743 = vmatpush2.msra.mxu0 0.0
        %744 = vmatprep.subr.mxu0 0.0
        %745 = vmatpush2.msra.mxu0 0.0
        %746 = vmatprep.subr.mxu0 0.0
        %747 = vmatpush2.msra.mxu0 0.0
        %748 = vmatprep.subr.mxu0 0.0
        %749 = vmatpush2.msra.mxu0 0.0
        %750 = vmatprep.subr.mxu0 0.0
        %751 = vmatpush2.msra.mxu0 0.0
        %752 = vmatprep.subr.mxu0 0.0
        %753 = vmatpush2.msra.mxu0 0.0
        %754 = vmatprep.mubr.f32.mxu0 0.0
        %755 = vmatmul.mubr.f32.gmra.mxu0 %v644
        %v756 = vpop.f32.mrf.mxu0
        %v757 = vadd.f32 %v683, %v756
        %v758 = vpop.f32.mrf.mxu0
        %v759 = vadd.f32 %v687, %v758
        %760 = vmatprep.mubr.f32.mxu0 0.0
        %761 = vmatmul.mubr.f32.gmra.mxu0 %v645
        %v762 = vpop.f32.mrf.mxu0
        %v763 = vadd.f32 %v683, %v762
        %v764 = vpop.f32.mrf.mxu0
        %v765 = vadd.f32 %v687, %v764
        %766 = vdwg.mxu0
        %v767 = vmax.f32 %v757, 0.0
        %v768 = vmax.f32 %v759, 0.0
        %v769 = vmax.f32 %v763, 0.0
        %v770 = vmax.f32 %v765, 0.0
        %v771 = vld [vmem:[%s611] sm:$0x3]
        %v772 = vld [vmem:[%s615] sm:$0x3]
        %v773 = vadd.f32 %v767, %v768
        %774 = vadd.xlane.f32.xlu0 %v773
        %v775 = vpop.xlane.xlu0 %774
        %v776 = vadd.f32 %v769, %v770
        %777 = vadd.xlane.f32.xlu0 %v776
        %v778 = vpop.xlane.xlu0 %777
        %v779 = vrcp.pop 256.0
        %v780 = vmul.f32 %v775, %v779
        %v781 = vmul.f32 %v778, %v779
        %v782 = vsub.f32 %v767, %v780
        %v783 = vsub.f32 %v768, %v780
        %v784 = vsub.f32 %v769, %v781
        %v785 = vsub.f32 %v770, %v781
        %v786 = vmul.f32 %v782, %v782
        %v787 = vmul.f32 %v783, %v783
        %v788 = vmul.f32 %v784, %v784
        %v789 = vmul.f32 %v785, %v785
        %v790 = vadd.f32 %v786, %v787
        %791 = vadd.xlane.f32.xlu0 %v790
        %v792 = vpop.xlane.xlu0 %791
        %v793 = vadd.f32 %v788, %v789
        %794 = vadd.xlane.f32.xlu0 %v793
        %v795 = vpop.xlane.xlu0 %794
        %v796 = vmul.f32 %v792, %v779
        %v797 = vmul.f32 %v795, %v779
        %v798 = vadd.f32 %v796, 1e-05
        %v799 = vadd.f32 %v797, 1e-05
        %v800 = vrsqrt.pop %v798
        %v801 = vrsqrt.pop %v799
        %v802 = vmul.f32 %v782, %v800
        %v803 = vmul.f32 %v783, %v800
        %v804 = vmul.f32 %v784, %v801
        %v805 = vmul.f32 %v785, %v801
        %v807 = vlaneseq
        %v808 = vshrl.u32 %v807, 7
        %v809 = vsub.s32 0, %v808
        %v810 = vrot.slane %v771, %v809
        %v811 = vlaneseq
        %v812 = vshrl.u32 %v811, 7
        %v813 = vsub.s32 1, %v812
        %v814 = vrot.slane %v771, %v813
        %v817 = vmul.f32 %v802, %v810
        %v818 = vmul.f32 %v803, %v814
        %v819 = vmul.f32 %v804, %v810
        %v820 = vmul.f32 %v805, %v814
        %v822 = vlaneseq
        %v823 = vshrl.u32 %v822, 7
        %v824 = vsub.s32 0, %v823
        %v825 = vrot.slane %v772, %v824
        %v826 = vlaneseq
        %v827 = vshrl.u32 %v826, 7
        %v828 = vsub.s32 1, %v827
        %v829 = vrot.slane %v772, %v828
        %v832 = vadd.f32 %v817, %v825
        %v833 = vadd.f32 %v818, %v829
        %v834 = vadd.f32 %v819, %v825
        %v835 = vadd.f32 %v820, %v829
        %v836 = vld [vmem:[%s620] sm:$0x3f]
        %v837 = vld [vmem:[%s620 + $0x8] sm:$0x3f]
        %v838 = vld [vmem:[%s624] sm:$0x3f]
        %841 = vrot.lane.b32.xlu0 %v832, 64
        %v842 = vpop.permute.xlu0 %841
        %843 = vrot.lane.b32.xlu0 %v834, 64
        %v844 = vpop.permute.xlu0 %843
        %848 = vset.pattern.permute.xlu0 0
        %849 = vperm.xlu0 %848, %v838
        %v850 = vpop.permute.xlu0 %849
        %vm852 = vcmask 392192
        %v854 = vsel %vm852, %v836, 0
        %856 = vmatprep.subr.mxu0 0.0
        %857 = vmatpush1.msra.mxu0 0.0
        %858 = vmatprep.subr.mxu0 0.0
        %859 = vmatpush1.msra.mxu0 0.0
        %860 = vmatprep.subr.mxu0 0.0
        %861 = vmatpush1.msra.mxu0 0.0
        %862 = vmatprep.subr.mxu0 0.0
        %863 = vmatpush1.msra.mxu0 0.0
        %864 = vmatprep.subr.mxu0 0.0
        %865 = vmatpush1.msra.mxu0 0.0
        %866 = vmatprep.subr.mxu0 0.0
        %867 = vmatpush1.msra.mxu0 0.0
        %868 = vmatprep.subr.mxu0 0.0
        %869 = vmatpush1.msra.mxu0 0.0
        %870 = vmatprep.subr.mxu0 0.0
        %871 = vmatpush1.msra.mxu0 0.0
        %872 = vmatprep.subr.mxu0 0.0
        %873 = vmatpush1.msra.mxu0 0.0
        %874 = vmatprep.subr.mxu0 0.0
        %875 = vmatpush1.msra.mxu0 0.0
        %876 = vmatprep.subr.mxu0 0.0
        %877 = vmatpush1.msra.mxu0 %v835
        %878 = vmatprep.subr.mxu0 0.0
        %879 = vmatpush1.msra.mxu0 %v833
        %880 = vmatprep.subr.mxu0 0.0
        %881 = vmatpush1.msra.mxu0 %v844
        %882 = vmatprep.subr.mxu0 0.0
        %883 = vmatpush1.msra.mxu0 %v842
        %884 = vmatprep.subr.mxu0 0.0
        %885 = vmatpush1.msra.mxu0 %v834
        %886 = vmatprep.subr.mxu0 0.0
        %887 = vmatpush1.msra.mxu0 %v832
        %888 = vmatprep.subr.mxu0 0.0
        %889 = vmatpush2.msra.mxu0 0.0
        %890 = vmatprep.subr.mxu0 0.0
        %891 = vmatpush2.msra.mxu0 0.0
        %892 = vmatprep.subr.mxu0 0.0
        %893 = vmatpush2.msra.mxu0 0.0
        %894 = vmatprep.subr.mxu0 0.0
        %895 = vmatpush2.msra.mxu0 0.0
        %896 = vmatprep.subr.mxu0 0.0
        %897 = vmatpush2.msra.mxu0 0.0
        %898 = vmatprep.subr.mxu0 0.0
        %899 = vmatpush2.msra.mxu0 0.0
        %900 = vmatprep.subr.mxu0 0.0
        %901 = vmatpush2.msra.mxu0 0.0
        %902 = vmatprep.subr.mxu0 0.0
        %903 = vmatpush2.msra.mxu0 0.0
        %904 = vmatprep.subr.mxu0 0.0
        %905 = vmatpush2.msra.mxu0 0.0
        %906 = vmatprep.subr.mxu0 0.0
        %907 = vmatpush2.msra.mxu0 0.0
        %908 = vmatprep.subr.mxu0 0.0
        %909 = vmatpush2.msra.mxu0 0.0
        %910 = vmatprep.subr.mxu0 0.0
        %911 = vmatpush2.msra.mxu0 0.0
        %912 = vmatprep.subr.mxu0 0.0
        %913 = vmatpush2.msra.mxu0 0.0
        %914 = vmatprep.subr.mxu0 0.0
        %915 = vmatpush2.msra.mxu0 0.0
        %916 = vmatprep.subr.mxu0 0.0
        %917 = vmatpush2.msra.mxu0 0.0
        %918 = vmatprep.subr.mxu0 0.0
        %919 = vmatpush2.msra.mxu0 0.0
        %920 = vmatprep.mubr.f32.mxu0 0.0
        %921 = vmatmul.mubr.f32.gmra.mxu0 %v854
        %v922 = vpop.f32.mrf.mxu0
        %v923 = vadd.f32 %v850, %v922
        %v924 = vpop.f32.mrf.mxu0
        %925 = vdwg.mxu0
        %v926 = vmax.f32 %v923, 0.0
        %v927 = vld [vmem:[%s513] sm:$0xff]
        %v928 = vld [vmem:[%s513 + $0x8] sm:$0xff]
        %v929 = vld [vmem:[%s513 + $0x10] sm:$0xff]
        %v930 = vld [vmem:[%s513 + $0x18] sm:$0xff]
        %v931 = vld [vmem:[%s513 + $0x20] sm:$0xff]
        %v932 = vld [vmem:[%s513 + $0x28] sm:$0xff]
        %v933 = vld [vmem:[%s513 + $0x30] sm:$0xff]
        %v934 = vld [vmem:[%s513 + $0x38] sm:$0xff]
        %935 = vrot.lane.b32.xlu0 %v832, 127
        %v936 = vpop.permute.xlu0 %935
        %937 = vrot.lane.b32.xlu0 %v834, 127
        %v938 = vpop.permute.xlu0 %937
        %941 = vset.pattern.permute.xlu0 1
        %942 = vperm.xlu0 %941, %v838
        %v943 = vpop.permute.xlu0 %942
        %945 = vrot.lane.b32.xlu0 %v836, 80
        %v946 = vpop.permute.xlu0 %945
        %v947 = vsel %vm852, %v946, 0
        %949 = vmatprep.subr.mxu0 0.0
        %950 = vmatpush1.msra.mxu0 0.0
        %951 = vmatprep.subr.mxu0 0.0
        %952 = vmatpush1.msra.mxu0 0.0
        %953 = vmatprep.subr.mxu0 0.0
        %954 = vmatpush1.msra.mxu0 0.0
        %955 = vmatprep.subr.mxu0 0.0
        %956 = vmatpush1.msra.mxu0 0.0
        %957 = vmatprep.subr.mxu0 0.0
        %958 = vmatpush1.msra.mxu0 0.0
        %959 = vmatprep.subr.mxu0 0.0
        %960 = vmatpush1.msra.mxu0 0.0
        %961 = vmatprep.subr.mxu0 0.0
        %962 = vmatpush1.msra.mxu0 0.0
        %963 = vmatprep.subr.mxu0 0.0
        %964 = vmatpush1.msra.mxu0 0.0
        %965 = vmatprep.subr.mxu0 0.0
        %966 = vmatpush1.msra.mxu0 0.0
        %967 = vmatprep.subr.mxu0 0.0
        %968 = vmatpush1.msra.mxu0 0.0
        %969 = vmatprep.subr.mxu0 0.0
        %970 = vmatpush1.msra.mxu0 %v938
        %971 = vmatprep.subr.mxu0 0.0
        %972 = vmatpush1.msra.mxu0 %v936
        %973 = vmatprep.subr.mxu0 0.0
        %974 = vmatpush1.msra.mxu0 %v835
        %975 = vmatprep.subr.mxu0 0.0
        %976 = vmatpush1.msra.mxu0 %v833
        %977 = vmatprep.subr.mxu0 0.0
        %978 = vmatpush1.msra.mxu0 %v834
        %979 = vmatprep.subr.mxu0 0.0
        %980 = vmatpush1.msra.mxu0 %v832
        %981 = vmatprep.subr.mxu0 0.0
        %982 = vmatpush2.msra.mxu0 0.0
        %983 = vmatprep.subr.mxu0 0.0
        %984 = vmatpush2.msra.mxu0 0.0
        %985 = vmatprep.subr.mxu0 0.0
        %986 = vmatpush2.msra.mxu0 0.0
        %987 = vmatprep.subr.mxu0 0.0
        %988 = vmatpush2.msra.mxu0 0.0
        %989 = vmatprep.subr.mxu0 0.0
        %990 = vmatpush2.msra.mxu0 0.0
        %991 = vmatprep.subr.mxu0 0.0
        %992 = vmatpush2.msra.mxu0 0.0
        %993 = vmatprep.subr.mxu0 0.0
        %994 = vmatpush2.msra.mxu0 0.0
        %995 = vmatprep.subr.mxu0 0.0
        %996 = vmatpush2.msra.mxu0 0.0
        %997 = vmatprep.subr.mxu0 0.0
        %998 = vmatpush2.msra.mxu0 0.0
        %999 = vmatprep.subr.mxu0 0.0
        %1000 = vmatpush2.msra.mxu0 0.0
        %1001 = vmatprep.subr.mxu0 0.0
        %1002 = vmatpush2.msra.mxu0 0.0
        %1003 = vmatprep.subr.mxu0 0.0
        %1004 = vmatpush2.msra.mxu0 0.0
        %1005 = vmatprep.subr.mxu0 0.0
        %1006 = vmatpush2.msra.mxu0 0.0
        %1007 = vmatprep.subr.mxu0 0.0
        %1008 = vmatpush2.msra.mxu0 0.0
        %1009 = vmatprep.subr.mxu0 0.0
        %1010 = vmatpush2.msra.mxu0 0.0
        %1011 = vmatprep.subr.mxu0 0.0
        %1012 = vmatpush2.msra.mxu0 0.0
        %1013 = vmatprep.mubr.f32.mxu0 0.0
        %1014 = vmatmul.mubr.f32.gmra.mxu0 %v947
        %v1015 = vpop.f32.mrf.mxu0
        %v1016 = vadd.f32 %v943, %v1015
        %v1017 = vpop.f32.mrf.mxu0
        %1018 = vdwg.mxu0
        %v1019 = vmax.f32 %v1016, 0.0
        %s1020 = scalar_lea.vmem %s513, 64 [#allocation4]
        %v1021 = vld [vmem:[%s1020] sm:$0xff]
        %v1022 = vld [vmem:[%s1020 + $0x8] sm:$0xff]
        %v1023 = vld [vmem:[%s1020 + $0x10] sm:$0xff]
        %v1024 = vld [vmem:[%s1020 + $0x18] sm:$0xff]
        %v1025 = vld [vmem:[%s1020 + $0x20] sm:$0xff]
        %v1026 = vld [vmem:[%s1020 + $0x28] sm:$0xff]
        %v1027 = vld [vmem:[%s1020 + $0x30] sm:$0xff]
        %v1028 = vld [vmem:[%s1020 + $0x38] sm:$0xff]
        %vm1029 = vcmask 523264
        %v1031 = vsel %vm1029, %v1019, 0
        %1033 = vmatprep.subr.mxu0 0.0
        %1034 = vmatpush1.msra.mxu0 0.0
        %1035 = vmatprep.subr.mxu0 0.0
        %1036 = vmatpush1.msra.mxu0 0.0
        %1037 = vmatprep.subr.mxu0 0.0
        %1038 = vmatpush1.msra.mxu0 0.0
        %1039 = vmatprep.subr.mxu0 0.0
        %1040 = vmatpush1.msra.mxu0 0.0
        %1041 = vmatprep.subr.mxu0 0.0
        %1042 = vmatpush1.msra.mxu0 0.0
        %1043 = vmatprep.subr.mxu0 0.0
        %1044 = vmatpush1.msra.mxu0 0.0
        %1045 = vmatprep.subr.mxu0 0.0
        %1046 = vmatpush1.msra.mxu0 0.0
        %1047 = vmatprep.subr.mxu0 0.0
        %1048 = vmatpush1.msra.mxu0 0.0
        %1049 = vmatprep.subr.mxu0 0.0
        %1050 = vmatpush1.msra.mxu0 %v1028
        %1051 = vmatprep.subr.mxu0 0.0
        %1052 = vmatpush1.msra.mxu0 %v1027
        %1053 = vmatprep.subr.mxu0 0.0
        %1054 = vmatpush1.msra.mxu0 %v1026
        %1055 = vmatprep.subr.mxu0 0.0
        %1056 = vmatpush1.msra.mxu0 %v1025
        %1057 = vmatprep.subr.mxu0 0.0
        %1058 = vmatpush1.msra.mxu0 %v1024
        %1059 = vmatprep.subr.mxu0 0.0
        %1060 = vmatpush1.msra.mxu0 %v1023
        %1061 = vmatprep.subr.mxu0 0.0
        %1062 = vmatpush1.msra.mxu0 %v1022
        %1063 = vmatprep.subr.mxu0 0.0
        %1064 = vmatpush1.msra.mxu0 %v1021
        %1065 = vmatprep.subr.mxu0 0.0
        %1066 = vmatpush2.msra.mxu0 0.0
        %1067 = vmatprep.subr.mxu0 0.0
        %1068 = vmatpush2.msra.mxu0 0.0
        %1069 = vmatprep.subr.mxu0 0.0
        %1070 = vmatpush2.msra.mxu0 0.0
        %1071 = vmatprep.subr.mxu0 0.0
        %1072 = vmatpush2.msra.mxu0 0.0
        %1073 = vmatprep.subr.mxu0 0.0
        %1074 = vmatpush2.msra.mxu0 0.0
        %1075 = vmatprep.subr.mxu0 0.0
        %1076 = vmatpush2.msra.mxu0 0.0
        %1077 = vmatprep.subr.mxu0 0.0
        %1078 = vmatpush2.msra.mxu0 0.0
        %1079 = vmatprep.subr.mxu0 0.0
        %1080 = vmatpush2.msra.mxu0 0.0
        %1081 = vmatprep.subr.mxu0 0.0
        %1082 = vmatpush2.msra.mxu0 0.0
        %1083 = vmatprep.subr.mxu0 0.0
        %1084 = vmatpush2.msra.mxu0 0.0
        %1085 = vmatprep.subr.mxu0 0.0
        %1086 = vmatpush2.msra.mxu0 0.0
        %1087 = vmatprep.subr.mxu0 0.0
        %1088 = vmatpush2.msra.mxu0 0.0
        %1089 = vmatprep.subr.mxu0 0.0
        %1090 = vmatpush2.msra.mxu0 0.0
        %1091 = vmatprep.subr.mxu0 0.0
        %1092 = vmatpush2.msra.mxu0 0.0
        %1093 = vmatprep.subr.mxu0 0.0
        %1094 = vmatpush2.msra.mxu0 0.0
        %1095 = vmatprep.subr.mxu0 0.0
        %1096 = vmatpush2.msra.mxu0 0.0
        %1097 = vmatprep.mubr.f32.mxu0 0.0
        %1098 = vmatmul.mubr.f32.gmra.mxu0 %v1031
        %v1099 = vpop.f32.mrf.mxu0
        %v1100 = vadd.f32 0.0, %v1099
        %v1101 = vpop.f32.mrf.mxu0
        %1102 = vdwg.mxu0
        %v1104 = vsel %vm1029, %v926, 0
        %1106 = vmatprep.subr.mxu0 0.0
        %1107 = vmatpush1.msra.mxu0 0.0
        %1108 = vmatprep.subr.mxu0 0.0
        %1109 = vmatpush1.msra.mxu0 0.0
        %1110 = vmatprep.subr.mxu0 0.0
        %1111 = vmatpush1.msra.mxu0 0.0
        %1112 = vmatprep.subr.mxu0 0.0
        %1113 = vmatpush1.msra.mxu0 0.0
        %1114 = vmatprep.subr.mxu0 0.0
        %1115 = vmatpush1.msra.mxu0 0.0
        %1116 = vmatprep.subr.mxu0 0.0
        %1117 = vmatpush1.msra.mxu0 0.0
        %1118 = vmatprep.subr.mxu0 0.0
        %1119 = vmatpush1.msra.mxu0 0.0
        %1120 = vmatprep.subr.mxu0 0.0
        %1121 = vmatpush1.msra.mxu0 0.0
        %1122 = vmatprep.subr.mxu0 0.0
        %1123 = vmatpush1.msra.mxu0 %v934
        %1124 = vmatprep.subr.mxu0 0.0
        %1125 = vmatpush1.msra.mxu0 %v933
        %1126 = vmatprep.subr.mxu0 0.0
        %1127 = vmatpush1.msra.mxu0 %v932
        %1128 = vmatprep.subr.mxu0 0.0
        %1129 = vmatpush1.msra.mxu0 %v931
        %1130 = vmatprep.subr.mxu0 0.0
        %1131 = vmatpush1.msra.mxu0 %v930
        %1132 = vmatprep.subr.mxu0 0.0
        %1133 = vmatpush1.msra.mxu0 %v929
        %1134 = vmatprep.subr.mxu0 0.0
        %1135 = vmatpush1.msra.mxu0 %v928
        %1136 = vmatprep.subr.mxu0 0.0
        %1137 = vmatpush1.msra.mxu0 %v927
        %1138 = vmatprep.subr.mxu0 0.0
        %1139 = vmatpush2.msra.mxu0 0.0
        %1140 = vmatprep.subr.mxu0 0.0
        %1141 = vmatpush2.msra.mxu0 0.0
        %1142 = vmatprep.subr.mxu0 0.0
        %1143 = vmatpush2.msra.mxu0 0.0
        %1144 = vmatprep.subr.mxu0 0.0
        %1145 = vmatpush2.msra.mxu0 0.0
        %1146 = vmatprep.subr.mxu0 0.0
        %1147 = vmatpush2.msra.mxu0 0.0
        %1148 = vmatprep.subr.mxu0 0.0
        %1149 = vmatpush2.msra.mxu0 0.0
        %1150 = vmatprep.subr.mxu0 0.0
        %1151 = vmatpush2.msra.mxu0 0.0
        %1152 = vmatprep.subr.mxu0 0.0
        %1153 = vmatpush2.msra.mxu0 0.0
        %1154 = vmatprep.subr.mxu0 0.0
        %1155 = vmatpush2.msra.mxu0 0.0
        %1156 = vmatprep.subr.mxu0 0.0
        %1157 = vmatpush2.msra.mxu0 0.0
        %1158 = vmatprep.subr.mxu0 0.0
        %1159 = vmatpush2.msra.mxu0 0.0
        %1160 = vmatprep.subr.mxu0 0.0
        %1161 = vmatpush2.msra.mxu0 0.0
        %1162 = vmatprep.subr.mxu0 0.0
        %1163 = vmatpush2.msra.mxu0 0.0
        %1164 = vmatprep.subr.mxu0 0.0
        %1165 = vmatpush2.msra.mxu0 0.0
        %1166 = vmatprep.subr.mxu0 0.0
        %1167 = vmatpush2.msra.mxu0 0.0
        %1168 = vmatprep.subr.mxu0 0.0
        %1169 = vmatpush2.msra.mxu0 0.0
        %1170 = vmatprep.mubr.f32.mxu0 0.0
        %1171 = vmatmul.mubr.f32.gmra.mxu0 %v1104
        %v1172 = vpop.f32.mrf.mxu0
        %v1173 = vadd.f32 %v1100, %v1172
        %v1174 = vpop.f32.mrf.mxu0
        %1175 = vdwg.mxu0
        %1178 = vrot.lane.b32.xlu0 %v833, 64
        %v1179 = vpop.permute.xlu0 %1178
        %1180 = vrot.lane.b32.xlu0 %v835, 64
        %v1181 = vpop.permute.xlu0 %1180
        %1184 = vrot.lane.b32.xlu0 %v833, 127
        %v1185 = vpop.permute.xlu0 %1184
        %1186 = vrot.lane.b32.xlu0 %v835, 127
        %v1187 = vpop.permute.xlu0 %1186
        %1190 = vset.pattern.permute.xlu0 2
        %1191 = vperm.xlu0 %1190, %v838
        %v1192 = vpop.permute.xlu0 %1191
        %1195 = vrot.lane.b32.xlu0 %v836, 32
        %v1196 = vpop.permute.xlu0 %1195
        %1197 = vrot.lane.b32.xlu0 %v837, 32
        %v1198 = vpop.permute.xlu0 %1197
        %vm1199 = vcmask 261120
        %v1200 = vsel %vm1199, %v1196, %v1198
        %v1201 = vsel %vm852, %v1200, 0
        %1203 = vmatprep.subr.mxu0 0.0
        %1204 = vmatpush1.msra.mxu0 0.0
        %1205 = vmatprep.subr.mxu0 0.0
        %1206 = vmatpush1.msra.mxu0 0.0
        %1207 = vmatprep.subr.mxu0 0.0
        %1208 = vmatpush1.msra.mxu0 0.0
        %1209 = vmatprep.subr.mxu0 0.0
        %1210 = vmatpush1.msra.mxu0 0.0
        %1211 = vmatprep.subr.mxu0 0.0
        %1212 = vmatpush1.msra.mxu0 0.0
        %1213 = vmatprep.subr.mxu0 0.0
        %1214 = vmatpush1.msra.mxu0 0.0
        %1215 = vmatprep.subr.mxu0 0.0
        %1216 = vmatpush1.msra.mxu0 0.0
        %1217 = vmatprep.subr.mxu0 0.0
        %1218 = vmatpush1.msra.mxu0 0.0
        %1219 = vmatprep.subr.mxu0 0.0
        %1220 = vmatpush1.msra.mxu0 0.0
        %1221 = vmatprep.subr.mxu0 0.0
        %1222 = vmatpush1.msra.mxu0 0.0
        %1223 = vmatprep.subr.mxu0 0.0
        %1224 = vmatpush1.msra.mxu0 %v1187
        %1225 = vmatprep.subr.mxu0 0.0
        %1226 = vmatpush1.msra.mxu0 %v1185
        %1227 = vmatprep.subr.mxu0 0.0
        %1228 = vmatpush1.msra.mxu0 %v1181
        %1229 = vmatprep.subr.mxu0 0.0
        %1230 = vmatpush1.msra.mxu0 %v1179
        %1231 = vmatprep.subr.mxu0 0.0
        %1232 = vmatpush1.msra.mxu0 %v834
        %1233 = vmatprep.subr.mxu0 0.0
        %1234 = vmatpush1.msra.mxu0 %v832
        %1235 = vmatprep.subr.mxu0 0.0
        %1236 = vmatpush2.msra.mxu0 0.0
        %1237 = vmatprep.subr.mxu0 0.0
        %1238 = vmatpush2.msra.mxu0 0.0
        %1239 = vmatprep.subr.mxu0 0.0
        %1240 = vmatpush2.msra.mxu0 0.0
        %1241 = vmatprep.subr.mxu0 0.0
        %1242 = vmatpush2.msra.mxu0 0.0
        %1243 = vmatprep.subr.mxu0 0.0
        %1244 = vmatpush2.msra.mxu0 0.0
        %1245 = vmatprep.subr.mxu0 0.0
        %1246 = vmatpush2.msra.mxu0 0.0
        %1247 = vmatprep.subr.mxu0 0.0
        %1248 = vmatpush2.msra.mxu0 0.0
        %1249 = vmatprep.subr.mxu0 0.0
        %1250 = vmatpush2.msra.mxu0 0.0
        %1251 = vmatprep.subr.mxu0 0.0
        %1252 = vmatpush2.msra.mxu0 0.0
        %1253 = vmatprep.subr.mxu0 0.0
        %1254 = vmatpush2.msra.mxu0 0.0
        %1255 = vmatprep.subr.mxu0 0.0
        %1256 = vmatpush2.msra.mxu0 0.0
        %1257 = vmatprep.subr.mxu0 0.0
        %1258 = vmatpush2.msra.mxu0 0.0
        %1259 = vmatprep.subr.mxu0 0.0
        %1260 = vmatpush2.msra.mxu0 0.0
        %1261 = vmatprep.subr.mxu0 0.0
        %1262 = vmatpush2.msra.mxu0 0.0
        %1263 = vmatprep.subr.mxu0 0.0
        %1264 = vmatpush2.msra.mxu0 0.0
        %1265 = vmatprep.subr.mxu0 0.0
        %1266 = vmatpush2.msra.mxu0 0.0
        %1267 = vmatprep.mubr.f32.mxu0 0.0
        %1268 = vmatmul.mubr.f32.gmra.mxu0 %v1201
        %v1269 = vpop.f32.mrf.mxu0
        %v1270 = vadd.f32 %v1192, %v1269
        %v1271 = vpop.f32.mrf.mxu0
        %1272 = vdwg.mxu0
        %v1273 = vmax.f32 %v1270, 0.0
        %s1274 = scalar_lea.vmem %s513, 128 [#allocation4]
        %v1275 = vld [vmem:[%s1274] sm:$0xff]
        %v1276 = vld [vmem:[%s1274 + $0x8] sm:$0xff]
        %v1277 = vld [vmem:[%s1274 + $0x10] sm:$0xff]
        %v1278 = vld [vmem:[%s1274 + $0x18] sm:$0xff]
        %v1279 = vld [vmem:[%s1274 + $0x20] sm:$0xff]
        %v1280 = vld [vmem:[%s1274 + $0x28] sm:$0xff]
        %v1281 = vld [vmem:[%s1274 + $0x30] sm:$0xff]
        %v1282 = vld [vmem:[%s1274 + $0x38] sm:$0xff]
        %v1284 = vsel %vm1029, %v1273, 0
        %1286 = vmatprep.subr.mxu0 0.0
        %1287 = vmatpush1.msra.mxu0 0.0
        %1288 = vmatprep.subr.mxu0 0.0
        %1289 = vmatpush1.msra.mxu0 0.0
        %1290 = vmatprep.subr.mxu0 0.0
        %1291 = vmatpush1.msra.mxu0 0.0
        %1292 = vmatprep.subr.mxu0 0.0
        %1293 = vmatpush1.msra.mxu0 0.0
        %1294 = vmatprep.subr.mxu0 0.0
        %1295 = vmatpush1.msra.mxu0 0.0
        %1296 = vmatprep.subr.mxu0 0.0
        %1297 = vmatpush1.msra.mxu0 0.0
        %1298 = vmatprep.subr.mxu0 0.0
        %1299 = vmatpush1.msra.mxu0 0.0
        %1300 = vmatprep.subr.mxu0 0.0
        %1301 = vmatpush1.msra.mxu0 0.0
        %1302 = vmatprep.subr.mxu0 0.0
        %1303 = vmatpush1.msra.mxu0 %v1282
        %1304 = vmatprep.subr.mxu0 0.0
        %1305 = vmatpush1.msra.mxu0 %v1281
        %1306 = vmatprep.subr.mxu0 0.0
        %1307 = vmatpush1.msra.mxu0 %v1280
        %1308 = vmatprep.subr.mxu0 0.0
        %1309 = vmatpush1.msra.mxu0 %v1279
        %1310 = vmatprep.subr.mxu0 0.0
        %1311 = vmatpush1.msra.mxu0 %v1278
        %1312 = vmatprep.subr.mxu0 0.0
        %1313 = vmatpush1.msra.mxu0 %v1277
        %1314 = vmatprep.subr.mxu0 0.0
        %1315 = vmatpush1.msra.mxu0 %v1276
        %1316 = vmatprep.subr.mxu0 0.0
        %1317 = vmatpush1.msra.mxu0 %v1275
        %1318 = vmatprep.subr.mxu0 0.0
        %1319 = vmatpush2.msra.mxu0 0.0
        %1320 = vmatprep.subr.mxu0 0.0
        %1321 = vmatpush2.msra.mxu0 0.0
        %1322 = vmatprep.subr.mxu0 0.0
        %1323 = vmatpush2.msra.mxu0 0.0
        %1324 = vmatprep.subr.mxu0 0.0
        %1325 = vmatpush2.msra.mxu0 0.0
        %1326 = vmatprep.subr.mxu0 0.0
        %1327 = vmatpush2.msra.mxu0 0.0
        %1328 = vmatprep.subr.mxu0 0.0
        %1329 = vmatpush2.msra.mxu0 0.0
        %1330 = vmatprep.subr.mxu0 0.0
        %1331 = vmatpush2.msra.mxu0 0.0
        %1332 = vmatprep.subr.mxu0 0.0
        %1333 = vmatpush2.msra.mxu0 0.0
        %1334 = vmatprep.subr.mxu0 0.0
        %1335 = vmatpush2.msra.mxu0 0.0
        %1336 = vmatprep.subr.mxu0 0.0
        %1337 = vmatpush2.msra.mxu0 0.0
        %1338 = vmatprep.subr.mxu0 0.0
        %1339 = vmatpush2.msra.mxu0 0.0
        %1340 = vmatprep.subr.mxu0 0.0
        %1341 = vmatpush2.msra.mxu0 0.0
        %1342 = vmatprep.subr.mxu0 0.0
        %1343 = vmatpush2.msra.mxu0 0.0
        %1344 = vmatprep.subr.mxu0 0.0
        %1345 = vmatpush2.msra.mxu0 0.0
        %1346 = vmatprep.subr.mxu0 0.0
        %1347 = vmatpush2.msra.mxu0 0.0
        %1348 = vmatprep.subr.mxu0 0.0
        %1349 = vmatpush2.msra.mxu0 0.0
        %1350 = vmatprep.mubr.f32.mxu0 0.0
        %1351 = vmatmul.mubr.f32.gmra.mxu0 %v1284
        %v1352 = vpop.f32.mrf.mxu0
        %v1353 = vadd.f32 0.0, %v1352
        %v1354 = vpop.f32.mrf.mxu0
        %1355 = vdwg.mxu0
        %v1356 = vadd.f32 %v1173, %v1353
        %1357 = vset.pattern.permute.xlu0 3
        %1358 = vperm.xlu0 %1357, %v838
        %v1359 = vpop.permute.xlu0 %1358
        %1361 = vrot.lane.b32.xlu0 %v837, 112
        %v1362 = vpop.permute.xlu0 %1361
        %vm1363 = vcmask 130048
        %v1364 = vsel %vm1363, %v1362, 0
        %1366 = vmatprep.subr.mxu0 0.0
        %1367 = vmatpush1.msra.mxu0 0.0
        %1368 = vmatprep.subr.mxu0 0.0
        %1369 = vmatpush1.msra.mxu0 0.0
        %1370 = vmatprep.subr.mxu0 0.0
        %1371 = vmatpush1.msra.mxu0 0.0
        %1372 = vmatprep.subr.mxu0 0.0
        %1373 = vmatpush1.msra.mxu0 0.0
        %1374 = vmatprep.subr.mxu0 0.0
        %1375 = vmatpush1.msra.mxu0 0.0
        %1376 = vmatprep.subr.mxu0 0.0
        %1377 = vmatpush1.msra.mxu0 0.0
        %1378 = vmatprep.subr.mxu0 0.0
        %1379 = vmatpush1.msra.mxu0 0.0
        %1380 = vmatprep.subr.mxu0 0.0
        %1381 = vmatpush1.msra.mxu0 0.0
        %1382 = vmatprep.subr.mxu0 0.0
        %1383 = vmatpush1.msra.mxu0 0.0
        %1384 = vmatprep.subr.mxu0 0.0
        %1385 = vmatpush1.msra.mxu0 0.0
        %1386 = vmatprep.subr.mxu0 0.0
        %1387 = vmatpush1.msra.mxu0 0.0
        %1388 = vmatprep.subr.mxu0 0.0
        %1389 = vmatpush1.msra.mxu0 0.0
        %1390 = vmatprep.subr.mxu0 0.0
        %1391 = vmatpush1.msra.mxu0 0.0
        %1392 = vmatprep.subr.mxu0 0.0
        %1393 = vmatpush1.msra.mxu0 0.0
        %1394 = vmatprep.subr.mxu0 0.0
        %1395 = vmatpush1.msra.mxu0 %v834
        %1396 = vmatprep.subr.mxu0 0.0
        %1397 = vmatpush1.msra.mxu0 %v832
        %1398 = vmatprep.subr.mxu0 0.0
        %1399 = vmatpush2.msra.mxu0 0.0
        %1400 = vmatprep.subr.mxu0 0.0
        %1401 = vmatpush2.msra.mxu0 0.0
        %1402 = vmatprep.subr.mxu0 0.0
        %1403 = vmatpush2.msra.mxu0 0.0
        %1404 = vmatprep.subr.mxu0 0.0
        %1405 = vmatpush2.msra.mxu0 0.0
        %1406 = vmatprep.subr.mxu0 0.0
        %1407 = vmatpush2.msra.mxu0 0.0
        %1408 = vmatprep.subr.mxu0 0.0
        %1409 = vmatpush2.msra.mxu0 0.0
        %1410 = vmatprep.subr.mxu0 0.0
        %1411 = vmatpush2.msra.mxu0 0.0
        %1412 = vmatprep.subr.mxu0 0.0
        %1413 = vmatpush2.msra.mxu0 0.0
        %1414 = vmatprep.subr.mxu0 0.0
        %1415 = vmatpush2.msra.mxu0 0.0
        %1416 = vmatprep.subr.mxu0 0.0
        %1417 = vmatpush2.msra.mxu0 0.0
        %1418 = vmatprep.subr.mxu0 0.0
        %1419 = vmatpush2.msra.mxu0 0.0
        %1420 = vmatprep.subr.mxu0 0.0
        %1421 = vmatpush2.msra.mxu0 0.0
        %1422 = vmatprep.subr.mxu0 0.0
        %1423 = vmatpush2.msra.mxu0 0.0
        %1424 = vmatprep.subr.mxu0 0.0
        %1425 = vmatpush2.msra.mxu0 0.0
        %1426 = vmatprep.subr.mxu0 0.0
        %1427 = vmatpush2.msra.mxu0 0.0
        %1428 = vmatprep.subr.mxu0 0.0
        %1429 = vmatpush2.msra.mxu0 0.0
        %1430 = vmatprep.mubr.f32.mxu0 0.0
        %1431 = vmatmul.mubr.f32.gmra.mxu0 %v1364
        %v1432 = vpop.f32.mrf.mxu0
        %v1433 = vadd.f32 %v1359, %v1432
        %v1434 = vpop.f32.mrf.mxu0
        %1435 = vdwg.mxu0
        %v1436 = vmax.f32 %v1433, 0.0
        %s1437 = scalar_lea.vmem %s513, 192 [#allocation4]
        %v1438 = vld [vmem:[%s1437] sm:$0xff]
        %v1439 = vld [vmem:[%s1437 + $0x8] sm:$0xff]
        %v1440 = vld [vmem:[%s1437 + $0x10] sm:$0xff]
        %v1441 = vld [vmem:[%s1437 + $0x18] sm:$0xff]
        %v1442 = vld [vmem:[%s1437 + $0x20] sm:$0xff]
        %v1443 = vld [vmem:[%s1437 + $0x28] sm:$0xff]
        %v1444 = vld [vmem:[%s1437 + $0x30] sm:$0xff]
        %v1445 = vld [vmem:[%s1437 + $0x38] sm:$0xff]
        %v1447 = vsel %vm1029, %v1436, 0
        %1449 = vmatprep.subr.mxu0 0.0
        %1450 = vmatpush1.msra.mxu0 0.0
        %1451 = vmatprep.subr.mxu0 0.0
        %1452 = vmatpush1.msra.mxu0 0.0
        %1453 = vmatprep.subr.mxu0 0.0
        %1454 = vmatpush1.msra.mxu0 0.0
        %1455 = vmatprep.subr.mxu0 0.0
        %1456 = vmatpush1.msra.mxu0 0.0
        %1457 = vmatprep.subr.mxu0 0.0
        %1458 = vmatpush1.msra.mxu0 0.0
        %1459 = vmatprep.subr.mxu0 0.0
        %1460 = vmatpush1.msra.mxu0 0.0
        %1461 = vmatprep.subr.mxu0 0.0
        %1462 = vmatpush1.msra.mxu0 0.0
        %1463 = vmatprep.subr.mxu0 0.0
        %1464 = vmatpush1.msra.mxu0 0.0
        %1465 = vmatprep.subr.mxu0 0.0
        %1466 = vmatpush1.msra.mxu0 %v1445
        %1467 = vmatprep.subr.mxu0 0.0
        %1468 = vmatpush1.msra.mxu0 %v1444
        %1469 = vmatprep.subr.mxu0 0.0
        %1470 = vmatpush1.msra.mxu0 %v1443
        %1471 = vmatprep.subr.mxu0 0.0
        %1472 = vmatpush1.msra.mxu0 %v1442
        %1473 = vmatprep.subr.mxu0 0.0
        %1474 = vmatpush1.msra.mxu0 %v1441
        %1475 = vmatprep.subr.mxu0 0.0
        %1476 = vmatpush1.msra.mxu0 %v1440
        %1477 = vmatprep.subr.mxu0 0.0
        %1478 = vmatpush1.msra.mxu0 %v1439
        %1479 = vmatprep.subr.mxu0 0.0
        %1480 = vmatpush1.msra.mxu0 %v1438
        %1481 = vmatprep.subr.mxu0 0.0
        %1482 = vmatpush2.msra.mxu0 0.0
        %1483 = vmatprep.subr.mxu0 0.0
        %1484 = vmatpush2.msra.mxu0 0.0
        %1485 = vmatprep.subr.mxu0 0.0
        %1486 = vmatpush2.msra.mxu0 0.0
        %1487 = vmatprep.subr.mxu0 0.0
        %1488 = vmatpush2.msra.mxu0 0.0
        %1489 = vmatprep.subr.mxu0 0.0
        %1490 = vmatpush2.msra.mxu0 0.0
        %1491 = vmatprep.subr.mxu0 0.0
        %1492 = vmatpush2.msra.mxu0 0.0
        %1493 = vmatprep.subr.mxu0 0.0
        %1494 = vmatpush2.msra.mxu0 0.0
        %1495 = vmatprep.subr.mxu0 0.0
        %1496 = vmatpush2.msra.mxu0 0.0
        %1497 = vmatprep.subr.mxu0 0.0
        %1498 = vmatpush2.msra.mxu0 0.0
        %1499 = vmatprep.subr.mxu0 0.0
        %1500 = vmatpush2.msra.mxu0 0.0
        %1501 = vmatprep.subr.mxu0 0.0
        %1502 = vmatpush2.msra.mxu0 0.0
        %1503 = vmatprep.subr.mxu0 0.0
        %1504 = vmatpush2.msra.mxu0 0.0
        %1505 = vmatprep.subr.mxu0 0.0
        %1506 = vmatpush2.msra.mxu0 0.0
        %1507 = vmatprep.subr.mxu0 0.0
        %1508 = vmatpush2.msra.mxu0 0.0
        %1509 = vmatprep.subr.mxu0 0.0
        %1510 = vmatpush2.msra.mxu0 0.0
        %1511 = vmatprep.subr.mxu0 0.0
        %1512 = vmatpush2.msra.mxu0 0.0
        %1513 = vmatprep.mubr.f32.mxu0 0.0
        %1514 = vmatmul.mubr.f32.gmra.mxu0 %v1447
        %v1515 = vpop.f32.mrf.mxu0
        %v1516 = vadd.f32 0.0, %v1515
        %v1517 = vpop.f32.mrf.mxu0
        %1518 = vdwg.mxu0
        %v1519 = vadd.f32 %v1356, %v1516
        %v1520 = vld [vmem:[%s627] sm:$0x1]
        %v1522 = vlaneseq
        %v1523 = vshrl.u32 %v1522, 7
        %v1524 = vsub.s32 0, %v1523
        %v1525 = vrot.slane %v1520, %v1524
        %v1527 = vadd.f32 %v1519, %v1525
        %v1528 = vmax.f32 %v1527, 0.0
        %v1529 = vld [vmem:[%s630] sm:$0x1]
        %v1530 = vld [vmem:[%s633] sm:$0x1]
        %vm1531 = vcmask 1045504
        %v1532 = vsel %vm1531, %v1528, 0.0
        %1533 = vadd.xlane.f32.xlu0 %v1532
        %v1534 = vpop.xlane.xlu0 %1533
        %v1535 = vrcp.pop 128.0
        %v1536 = vmul.f32 %v1534, %v1535
        %v1537 = vsub.f32 %v1528, %v1536
        %v1538 = vmul.f32 %v1537, %v1537
        %v1539 = vsel %vm1531, %v1538, 0.0
        %1540 = vadd.xlane.f32.xlu0 %v1539
        %v1541 = vpop.xlane.xlu0 %1540
        %v1542 = vmul.f32 %v1541, %v1535
        %v1543 = vadd.f32 %v1542, 1e-05
        %v1544 = vrsqrt.pop %v1543
        %v1545 = vmul.f32 %v1537, %v1544
        %v1547 = vlaneseq
        %v1548 = vshrl.u32 %v1547, 7
        %v1549 = vsub.s32 0, %v1548
        %v1550 = vrot.slane %v1529, %v1549
        %v1552 = vmul.f32 %v1545, %v1550
        %v1554 = vlaneseq
        %v1555 = vshrl.u32 %v1554, 7
        %v1556 = vsub.s32 0, %v1555
        %v1557 = vrot.slane %v1530, %v1556
        %v1559 = vadd.f32 %v1552, %v1557
        %v1560 = vld [vmem:[%s638] sm:$0xff]
        %v1561 = vld [vmem:[%s638 + $0x8] sm:$0xff]
        %vm1562 = vcmask 48128
        %v1564 = vsel %vm1562, %v1560, 0
        %v1567 = vsel %vm1562, %v1561, 0
        %v1570 = vsel %vm1531, %v1559, 0
        %1572 = vmatprep.subr.mxu0 0.0
        %1573 = vmatpush1.msra.mxu0 0.0
        %1574 = vmatprep.subr.mxu0 0.0
        %1575 = vmatpush1.msra.mxu0 0.0
        %1576 = vmatprep.subr.mxu0 0.0
        %1577 = vmatpush1.msra.mxu0 0.0
        %1578 = vmatprep.subr.mxu0 0.0
        %1579 = vmatpush1.msra.mxu0 0.0
        %1580 = vmatprep.subr.mxu0 0.0
        %1581 = vmatpush1.msra.mxu0 0.0
        %1582 = vmatprep.subr.mxu0 0.0
        %1583 = vmatpush1.msra.mxu0 0.0
        %1584 = vmatprep.subr.mxu0 0.0
        %1585 = vmatpush1.msra.mxu0 0.0
        %1586 = vmatprep.subr.mxu0 0.0
        %1587 = vmatpush1.msra.mxu0 0.0
        %1588 = vmatprep.subr.mxu0 0.0
        %1589 = vmatpush1.msra.mxu0 0.0
        %1590 = vmatprep.subr.mxu0 0.0
        %1591 = vmatpush1.msra.mxu0 0.0
        %1592 = vmatprep.subr.mxu0 0.0
        %1593 = vmatpush1.msra.mxu0 0.0
        %1594 = vmatprep.subr.mxu0 0.0
        %1595 = vmatpush1.msra.mxu0 0.0
        %1596 = vmatprep.subr.mxu0 0.0
        %1597 = vmatpush1.msra.mxu0 0.0
        %1598 = vmatprep.subr.mxu0 0.0
        %1599 = vmatpush1.msra.mxu0 0.0
        %1600 = vmatprep.subr.mxu0 0.0
        %1601 = vmatpush1.msra.mxu0 0.0
        %1602 = vmatprep.subr.mxu0 0.0
        %1603 = vmatpush1.msra.mxu0 %v1570
        %1604 = vmatprep.subr.mxu0 0.0
        %1605 = vmatpush2.msra.mxu0 0.0
        %1606 = vmatprep.subr.mxu0 0.0
        %1607 = vmatpush2.msra.mxu0 0.0
        %1608 = vmatprep.subr.mxu0 0.0
        %1609 = vmatpush2.msra.mxu0 0.0
        %1610 = vmatprep.subr.mxu0 0.0
        %1611 = vmatpush2.msra.mxu0 0.0
        %1612 = vmatprep.subr.mxu0 0.0
        %1613 = vmatpush2.msra.mxu0 0.0
        %1614 = vmatprep.subr.mxu0 0.0
        %1615 = vmatpush2.msra.mxu0 0.0
        %1616 = vmatprep.subr.mxu0 0.0
        %1617 = vmatpush2.msra.mxu0 0.0
        %1618 = vmatprep.subr.mxu0 0.0
        %1619 = vmatpush2.msra.mxu0 0.0
        %1620 = vmatprep.subr.mxu0 0.0
        %1621 = vmatpush2.msra.mxu0 0.0
        %1622 = vmatprep.subr.mxu0 0.0
        %1623 = vmatpush2.msra.mxu0 0.0
        %1624 = vmatprep.subr.mxu0 0.0
        %1625 = vmatpush2.msra.mxu0 0.0
        %1626 = vmatprep.subr.mxu0 0.0
        %1627 = vmatpush2.msra.mxu0 0.0
        %1628 = vmatprep.subr.mxu0 0.0
        %1629 = vmatpush2.msra.mxu0 0.0
        %1630 = vmatprep.subr.mxu0 0.0
        %1631 = vmatpush2.msra.mxu0 0.0
        %1632 = vmatprep.subr.mxu0 0.0
        %1633 = vmatpush2.msra.mxu0 0.0
        %1634 = vmatprep.subr.mxu0 0.0
        %1635 = vmatpush2.msra.mxu0 0.0
        %1636 = vmatprep.mubr.f32.mxu0 0.0
        %1637 = vmatmul.mubr.f32.gmra.mxu0 %v1564
        %v1638 = vpop.f32.mrf.mxu0
        %v1639 = vadd.f32 0.0, %v1638
        %v1640 = vpop.f32.mrf.mxu0
        %1641 = vmatprep.mubr.f32.mxu0 0.0
        %1642 = vmatmul.mubr.f32.gmra.mxu0 %v1567
        %v1643 = vpop.f32.mrf.mxu0
        %v1644 = vadd.f32 0.0, %v1643
        %v1645 = vpop.f32.mrf.mxu0
        %1646 = vdwg.mxu0
        %v1647 = vadd.f32 %v644, %v1639
        %v1648 = vadd.f32 %v645, %v1644
        %1649 = vst [vmem:[%s643] sm:$0xff] %v1647
        %1650 = vst [vmem:[%s643 + $0x8] sm:$0xff] %v1648
        %p1651 = scmp.lt.s32.totalorder %s29, 2
        %s1652 = scalar_select %p1651, %s29, 2
        %s1653 = smul.addr %s1652, 2
        %s1654 = smul.addr %s1653, 8
        %s1655 = scalar_lea.vmem %s12, %s1654
        // Predicated region
        $region77: #{shot_level_encoder_forward.1} parent=67 // pred_check
          %p1656 = pneg %p359
        $region78: #{shot_level_encoder_forward.1} parent=67 // pred_check_branch
          %1658 = sbr.rel (%p1656) target = $region80
        $region79: #{shot_level_encoder_forward.1} parent=67 // pred_region
          _
        $region80: #{shot_level_encoder_forward.1} parent=67 // pred_fallthru
          _
      $region68: #{shot_level_encoder_forward.1} parent=5 // pred_fallthru
        _
      %p1659 = scmp.le.s32.totalorder 2, %s24
      // Predicated region
      $region81: #{shot_level_encoder_forward.1} parent=5 // pred_check
        %p1660 = pneg %p1659
      $region82: #{shot_level_encoder_forward.1} parent=5 // pred_check_branch
        %1662 = sbr.rel (%p1660) target = $region84
      $region83: #{shot_level_encoder_forward.1} parent=5 // pred_region
        %s1663 = ssub.s32 %s24, 2
        // Predicated region
        $region85: #{shot_level_encoder_forward.1} parent=83 // pred_check
          %p1664 = pneg %p365
        $region86: #{shot_level_encoder_forward.1} parent=83 // pred_check_branch
          %1666 = sbr.rel (%p1664) target = $region88
        $region87: #{shot_level_encoder_forward.1} parent=83 // pred_region
          %p1667 = scmp.lt.s32.totalorder %s30, 2
          %s1668 = scalar_select %p1667, %s30, 2
          %s1669 = smul.addr %s1668, 2
          %s1670 = smul.addr %s1669, 8
          %s1671 = scalar_lea.vmem %s12, %s1670
        $region88: #{shot_level_encoder_forward.1} parent=83 // pred_fallthru
          _
      $region84: #{shot_level_encoder_forward.1} parent=5 // pred_fallthru
        _
    $region6: #{shot_level_encoder_forward.1} parent=1 // loop_footer
      %s28 = sadd.s32 1, %s24
    $region7: #{shot_level_encoder_forward.1} parent=1 // loop_footer_branch
      %23 = sbr.rel target = $region3
    $region8: #{shot_level_encoder_forward.1} parent=1 // loop_exit
      _
    %1672 = vsyncpa [#allocation3], 1
    %s1673 = scalar_lea.sflag [#allocation3], 1
    %1674 = vsyncpa %s1673, 1
    %1675 = vsyncpa [#allocation5], 1
    %s1676 = scalar_lea.sflag [#allocation5], 1
    %1677 = vsyncpa %s1676, 1

</llo_original>
